<compile_context>
chip_gen: v7x
topology: tpu7x:2x2x1
jax: 0.10.0
libtpu: 0.0.40
codegen_flags: <defaults>
</compile_context>

<pallas_src>
import functools

import jax
import jax.numpy as jnp
from jax import lax
from jax.experimental import pallas as pl
from jax.experimental.pallas import tpu as pltpu


def _round_up(n, m):
    return ((n + m - 1) // m) * m


def _gru_kernel(x_ref,      # (ct, bb, I)    bf16 time-major input chunk
                wih_ref,    # (I, 3*Hp)      bf16 fused input->gate weights
                bih_ref,    # (1, 3*Hp)      f32  [b_ir+b_hr, b_iz+b_hz, b_in]
                whh_ref,    # (Hp, 3*Hp)     bf16 fused hidden->gate weights
                bhn_ref,    # (1, Hp)        f32  b_hn (r gates it -> separate)
                wfc_ref,    # (Hp, Op)       bf16 final Linear weight
                bfc_ref,    # (1, Op)        f32  final Linear bias
                out_ref,    # (bb, Op)       f32
                h_ref,      # VMEM scratch (bb, Hp) f32 hidden carry
                gx_ref,     # VMEM scratch (ct, bb, 3*Hp) f32 input projections
                *, seq_len):
    tc = pl.program_id(1)                     # time-chunk index (serial axis)
    ct, bb, ip = x_ref.shape
    hp = h_ref.shape[1]

    @pl.when(tc == 0)
    def _():
        h_ref[...] = jnp.zeros_like(h_ref)

    # ---- Input projection for the whole chunk: one bf16 MXU matmul, f32 acc.
    x_flat = x_ref[...].reshape(ct * bb, ip)
    gx_ref[...] = (jnp.dot(x_flat, wih_ref[...],
                           preferred_element_type=jnp.float32)
                   + bih_ref[...]).reshape(ct, bb, 3 * hp)

    # ---- Hoisted loop invariants.
    whh = whh_ref[...]                        # bf16
    bhn = bhn_ref[...]                        # f32
    mask_tail = (seq_len % ct) != 0           # static: only pad-tail configs

    # ---- Serial recurrence: one (bb,Hp)@(Hp,3Hp) bf16 matmul per step.
    def step(i, h):
        gx = gx_ref[i]                        # (bb, 3*hp) f32, dynamic index
        gh = jnp.dot(h.astype(whh.dtype), whh,
                     preferred_element_type=jnp.float32)
        # r and z share one fused sigmoid over a contiguous (bb, 2*Hp) slab.
        rz = jax.nn.sigmoid(gx[:, :2 * hp] + gh[:, :2 * hp])
        r = rz[:, :hp]
        z = rz[:, hp:]
        n = jnp.tanh(gx[:, 2 * hp:] + r * (gh[:, 2 * hp:] + bhn))
        h_new = n + z * (h - n)               # == (1 - z) * n + z * h
        if mask_tail:                         # padded (t >= T) steps are no-ops
            h_new = jnp.where(tc * ct + i < seq_len, h_new, h)
        return h_new

    h = lax.fori_loop(0, ct, step, h_ref[...], unroll=True)
    h_ref[...] = h

    # ---- fc(out[:, -1, :]) == fc(h_T) on the last time chunk.
    @pl.when(tc == pl.num_programs(1) - 1)
    def _():
        out_ref[...] = (jnp.dot(h.astype(wfc_ref.dtype), wfc_ref[...],
                                preferred_element_type=jnp.float32)
                        + bfc_ref[...])


def _pack_params(p, Hp, Op, compute_dtype=jnp.bfloat16):
    """Fuse per-gate PyTorch weights into padded, pre-transposed MXU layouts."""
    H = p["weight_hh"].shape[1]
    I = p["weight_ih"].shape[1]
    O = p["w_fc"].shape[0]

    wih = jnp.zeros((I, 3 * Hp), jnp.float32)
    whh = jnp.zeros((Hp, 3 * Hp), jnp.float32)
    bih = jnp.zeros((1, 3 * Hp), jnp.float32)
    for g in range(3):                                   # gate order: r, z, n
        wih = wih.at[:, g * Hp:g * Hp + H].set(p["weight_ih"][g * H:(g + 1) * H, :].T)
        whh = whh.at[:H, g * Hp:g * Hp + H].set(p["weight_hh"][g * H:(g + 1) * H, :].T)
    bih = bih.at[0, 0 * Hp:0 * Hp + H].set(p["bias_ih"][0:H] + p["bias_hh"][0:H])
    bih = bih.at[0, 1 * Hp:1 * Hp + H].set(p["bias_ih"][H:2 * H] + p["bias_hh"][H:2 * H])
    bih = bih.at[0, 2 * Hp:2 * Hp + H].set(p["bias_ih"][2 * H:3 * H])
    bhn = jnp.zeros((1, Hp), jnp.float32).at[0, :H].set(p["bias_hh"][2 * H:3 * H])
    wfc = jnp.zeros((Hp, Op), jnp.float32).at[:H, :O].set(p["w_fc"].T)
    bfc = jnp.zeros((1, Op), jnp.float32).at[0, :O].set(p["b_fc"])
    return (wih.astype(compute_dtype), bih, whh.astype(compute_dtype), bhn,
            wfc.astype(compute_dtype), bfc)


def gru_net_forward(x, params, *, time_chunk=16, batch_block=None):
    """x: (B, T, I) float32 (batch_first, like PyTorch). Returns (B, O) f32."""
    B, T, I = x.shape
    H = params["weight_hh"].shape[1]
    O = params["w_fc"].shape[0]

    Hp = _round_up(H, 128)       # lane multiples (gate slices stay tile-aligned)
    Op = _round_up(O, 128)       # lane-dense output stores

    # bf16 packs 16 sublanes per vreg -> batch blocks are 16-row multiples.
    B16 = _round_up(B, 16)
    if batch_block is None:
        bb = min(B16, 256)       # MXU-friendly M for big batches; Bp otherwise
    else:
        bb = _round_up(min(batch_block, B16), 16)
    Bp = _round_up(B, bb)        # bb always divides Bp

    ct = max(1, min(time_chunk, T))
    n_chunks = -(-T // ct)
    Tp = n_chunks * ct           # tail steps masked inside the kernel

    wih, bih, whh, bhn, wfc, bfc = _pack_params(params, Hp, Op)

    # Time-major, batch/time-padded, bf16 input.  Feature dim stays unpadded
    # (the x block spans the full I axis, which is legal for any I).
    xp = jnp.zeros((Tp, Bp, I), jnp.bfloat16)
    xp = xp.at[:T, :B, :].set(jnp.transpose(x, (1, 0, 2)).astype(jnp.bfloat16))

    grid = (Bp // bb, n_chunks)

    # Explicit VMEM budget: single-buffered weights + double-buffered x chunk
    # + out block + h / gx scratches + per-step temporaries, with headroom.
    weight_bytes = (2 * (wih.size + whh.size + wfc.size)
                    + 4 * (bih.size + bhn.size + bfc.size))
    stream_bytes = 2 * (2 * ct * bb * I) + 2 * (4 * bb * Op)
    scratch_bytes = 4 * bb * Hp + 4 * ct * bb * 3 * Hp
    temp_bytes = 6 * 4 * bb * 3 * Hp
    vmem_needed = weight_bytes + stream_bytes + scratch_bytes + temp_bytes
    vmem_limit = int(min(max(2 * vmem_needed, 32 << 20), 100 << 20))

    cost = pl.CostEstimate(
        flops=int(2 * Tp * Bp * I * 3 * Hp + 2 * Tp * Bp * Hp * 3 * Hp
                  + 2 * Bp * Hp * Op),
        transcendentals=int(3 * Tp * Bp * Hp),
        bytes_accessed=int(2 * (xp.size + wih.size + whh.size + wfc.size)
                           + 4 * (bih.size + bhn.size + bfc.size + Bp * Op)),
    )

    const = dict(pipeline_mode=pl.Buffered(1))   # loop-invariant operands

    out = pl.pallas_call(
        functools.partial(_gru_kernel, seq_len=T),
        out_shape=jax.ShapeDtypeStruct((Bp, Op), jnp.float32),
        grid_spec=pltpu.PrefetchScalarGridSpec(
            num_scalar_prefetch=0,
            grid=grid,
            in_specs=[
                pl.BlockSpec((ct, bb, I), lambda b, t: (t, b, 0)),       # x
                pl.BlockSpec((I, 3 * Hp), lambda b, t: (0, 0), **const),  # W_ih
                pl.BlockSpec((1, 3 * Hp), lambda b, t: (0, 0), **const),  # b_ih
                pl.BlockSpec((Hp, 3 * Hp), lambda b, t: (0, 0), **const),  # W_hh
                pl.BlockSpec((1, Hp), lambda b, t: (0, 0), **const),       # b_hn
                pl.BlockSpec((Hp, Op), lambda b, t: (0, 0), **const),      # W_fc
                pl.BlockSpec((1, Op), lambda b, t: (0, 0), **const),       # b_fc
            ],
            out_specs=pl.BlockSpec((bb, Op), lambda b, t: (b, 0)),
            scratch_shapes=[pltpu.VMEM((bb, Hp), jnp.float32),
                            pltpu.VMEM((ct, bb, 3 * Hp), jnp.float32)],
        ),
        compiler_params=pltpu.CompilerParams(
            dimension_semantics=("parallel", "arbitrary"),
            vmem_limit_bytes=vmem_limit),
        cost_estimate=cost,
    )(xp, wih, bih, whh, bhn, wfc, bfc)

    return out[:B, :O]


def init_params(key, input_size, hidden_size, output_size):
    """PyTorch-layout parameters (nn.GRU + nn.Linear default init bounds)."""
    k = 1.0 / jnp.sqrt(jnp.float32(hidden_size))
    keys = jax.random.split(key, 6)

    def u(kk, shape):
        return jax.random.uniform(kk, shape, jnp.float32, -k, k)

    return dict(
        weight_ih=u(keys[0], (3 * hidden_size, input_size)),   # [r, z, n] rows
        weight_hh=u(keys[1], (3 * hidden_size, hidden_size)),
        bias_ih=u(keys[2], (3 * hidden_size,)),
        bias_hh=u(keys[3], (3 * hidden_size,)),
        w_fc=u(keys[4], (output_size, hidden_size)),
        b_fc=u(keys[5], (output_size,)),
    )


def gru_net_reference(x, p):
    """Pure-JAX f32 reference of the same forward pass (PyTorch GRU semantics)."""
    B, T, I = x.shape
    H = p["weight_hh"].shape[1]
    Wir, Wiz, Win = jnp.split(p["weight_ih"], 3, axis=0)
    Whr, Whz, Whn = jnp.split(p["weight_hh"], 3, axis=0)
    bir, biz, bin_ = jnp.split(p["bias_ih"], 3)
    bhr, bhz, bhn = jnp.split(p["bias_hh"], 3)
    h = jnp.zeros((B, H), jnp.float32)
    for t in range(T):
        xt = x[:, t, :]
        r = jax.nn.sigmoid(xt @ Wir.T + bir + h @ Whr.T + bhr)
        z = jax.nn.sigmoid(xt @ Wiz.T + biz + h @ Whz.T + bhz)
        n = jnp.tanh(xt @ Win.T + bin_ + r * (h @ Whn.T + bhn))
        h = (1.0 - z) * n + z * h
    return h @ p["w_fc"].T + p["b_fc"]


if __name__ == "__main__":
    B, T, INPUT, HIDDEN, OUTPUT = 2, 8, 4, 32, 8

    key = jax.random.PRNGKey(0)
    kx, kp = jax.random.split(key)
    x = jax.random.normal(kx, (B, T, INPUT), jnp.float32)
    params = init_params(kp, INPUT, HIDDEN, OUTPUT)

    out = jax.block_until_ready(gru_net_forward(x, params))
    ref = gru_net_reference(x, params)

    assert out.shape == (B, OUTPUT)
    # bf16 MXU operands (f32 accumulation, f32 carry / nonlinearities) vs the
    # f32 XLA reference: differences at the ~1e-2 level are expected.
    assert jnp.allclose(out, ref, atol=5e-2, rtol=5e-2), (out, ref)

    print("KERNEL_OK")
</pallas_src>

<mosaic_0001>
module attributes {stable_mosaic.version = 11 : i64} {
  func.func @_gru_kernel(%arg0: i32, %arg1: i32, %arg2: memref<8x16x4xbf16, #tpu.memory_space<vmem>>, %arg3: memref<4x384xbf16, #tpu.memory_space<vmem>>, %arg4: memref<1x384xf32, #tpu.memory_space<vmem>>, %arg5: memref<128x384xbf16, #tpu.memory_space<vmem>>, %arg6: memref<1x128xf32, #tpu.memory_space<vmem>>, %arg7: memref<128x128xbf16, #tpu.memory_space<vmem>>, %arg8: memref<1x128xf32, #tpu.memory_space<vmem>>, %arg9: memref<16x128xf32, #tpu.memory_space<vmem>>, %arg10: memref<16x128xf32, #tpu.memory_space<vmem>>, %arg11: memref<8x16x384xf32, #tpu.memory_space<vmem>>) attributes {dimension_semantics = [#tpu.dimension_semantics<parallel>, #tpu.dimension_semantics<arbitrary>], iteration_bounds = array<i64: 1, 1>, scalar_prefetch = 0 : i64, scratch_operands = 2 : i64, tpu.core_type = #tpu.core_type<tc>, window_params = [{transform_indices = @transform_0, window_bounds = array<i64: 8, 16, 4>}, {pipeline_mode = #tpu.pipeline_mode<synchronous>, transform_indices = @transform_1, window_bounds = array<i64: 4, 384>}, {pipeline_mode = #tpu.pipeline_mode<synchronous>, transform_indices = @transform_2, window_bounds = array<i64: 1, 384>}, {pipeline_mode = #tpu.pipeline_mode<synchronous>, transform_indices = @transform_3, window_bounds = array<i64: 128, 384>}, {pipeline_mode = #tpu.pipeline_mode<synchronous>, transform_indices = @transform_4, window_bounds = array<i64: 1, 128>}, {pipeline_mode = #tpu.pipeline_mode<synchronous>, transform_indices = @transform_5, window_bounds = array<i64: 128, 128>}, {pipeline_mode = #tpu.pipeline_mode<synchronous>, transform_indices = @transform_6, window_bounds = array<i64: 1, 128>}, {transform_indices = @transform_7, window_bounds = array<i64: 16, 128>}]} {
    %c0_i32 = arith.constant 0 : i32
    %0 = arith.cmpi eq, %arg1, %c0_i32 : i32
    %1 = arith.extui %0 : i1 to i32
    %c0_i32_0 = arith.constant 0 : i32
    %2 = arith.cmpi ne, %1, %c0_i32_0 : i32
    scf.if %2 {
      %cst_53 = arith.constant 0.000000e+00 : f32
      %219 = vector.broadcast %cst_53 : f32 to vector<16x128xf32>
      %c0_54 = arith.constant 0 : index
      %c0_55 = arith.constant 0 : index
      %220 = vector.load %arg10[%c0_54, %c0_55] : memref<16x128xf32, #tpu.memory_space<vmem>>, vector<16x128xf32>
      tpu.vector_store %arg10[%c0_54, %c0_55], %219 {strides = array<i32>} : memref<16x128xf32, #tpu.memory_space<vmem>>, vector<16x128xf32>,
    } else {
    }
    %c0 = arith.constant 0 : index
    %c0_1 = arith.constant 0 : index
    %c0_2 = arith.constant 0 : index
    %3 = vector.load %arg2[%c0, %c0_1, %c0_2] : memref<8x16x4xbf16, #tpu.memory_space<vmem>>, vector<8x16x4xbf16>
    %4 = vector.shape_cast %3 : vector<8x16x4xbf16> to vector<128x4xbf16>
    %c0_3 = arith.constant 0 : index
    %c0_4 = arith.constant 0 : index
    %5 = vector.load %arg3[%c0_3, %c0_4] : memref<4x384xbf16, #tpu.memory_space<vmem>>, vector<4x384xbf16>
    %cst = arith.constant dense<0.000000e+00> : vector<128x384xf32>
    %6 = tpu.matmul %4, %5, %cst {dimension_numbers = #tpu.dot_dimension_numbers<[1], [0], [0], [1], [0, 0, 1, 1], [], []>} : vector<128x4xbf16>, vector<4x384xbf16>, vector<128x384xf32> -> vector<128x384xf32>
    %c0_5 = arith.constant 0 : index
    %c0_6 = arith.constant 0 : index
    %7 = vector.load %arg4[%c0_5, %c0_6] : memref<1x384xf32, #tpu.memory_space<vmem>>, vector<1x384xf32>
    %8 = vector.broadcast %7 : vector<1x384xf32> to vector<128x384xf32>
    %9 = arith.addf %6, %8 : vector<128x384xf32>
    %10 = vector.shape_cast %9 : vector<128x384xf32> to vector<8x16x384xf32>
    %c0_7 = arith.constant 0 : index
    %c0_8 = arith.constant 0 : index
    %c0_9 = arith.constant 0 : index
    %11 = vector.load %arg11[%c0_7, %c0_8, %c0_9] : memref<8x16x384xf32, #tpu.memory_space<vmem>>, vector<8x16x384xf32>
    tpu.vector_store %arg11[%c0_7, %c0_8, %c0_9], %10 {strides = array<i32>} : memref<8x16x384xf32, #tpu.memory_space<vmem>>, vector<8x16x384xf32>,
    %c0_10 = arith.constant 0 : index
    %c0_11 = arith.constant 0 : index
    %12 = vector.load %arg5[%c0_10, %c0_11] : memref<128x384xbf16, #tpu.memory_space<vmem>>, vector<128x384xbf16>
    %c0_12 = arith.constant 0 : index
    %c0_13 = arith.constant 0 : index
    %13 = vector.load %arg6[%c0_12, %c0_13] : memref<1x128xf32, #tpu.memory_space<vmem>>, vector<1x128xf32>
    %c0_14 = arith.constant 0 : index
    %c0_15 = arith.constant 0 : index
    %14 = vector.load %arg10[%c0_14, %c0_15] : memref<16x128xf32, #tpu.memory_space<vmem>>, vector<16x128xf32>
    %c0_i32_16 = arith.constant 0 : i32
    %15 = arith.index_cast %c0_i32_16 : i32 to index
    %c0_17 = arith.constant 0 : index
    %c0_18 = arith.constant 0 : index
    %16 = vector.load %arg11[%15, %c0_17, %c0_18] : memref<8x16x384xf32, #tpu.memory_space<vmem>>, vector<1x16x384xf32>
    %17 = vector.shape_cast %16 : vector<1x16x384xf32> to vector<16x384xf32>
    %18 = arith.truncf %14 : vector<16x128xf32> to vector<16x128xbf16>
    %cst_19 = arith.constant dense<0.000000e+00> : vector<16x384xf32>
    %19 = tpu.matmul %18, %12, %cst_19 {dimension_numbers = #tpu.dot_dimension_numbers<[1], [0], [0], [1], [0, 0, 1, 1], [], []>} : vector<16x128xbf16>, vector<128x384xbf16>, vector<16x384xf32> -> vector<16x384xf32>
    %20 = vector.extract_strided_slice %17 {offsets = [0, 0], sizes = [16, 256], strides = [1, 1]} : vector<16x384xf32> to vector<16x256xf32>
    %21 = vector.extract_strided_slice %19 {offsets = [0, 0], sizes = [16, 256], strides = [1, 1]} : vector<16x384xf32> to vector<16x256xf32>
    %22 = arith.addf %20, %21 : vector<16x256xf32>
    %23 = arith.negf %22 : vector<16x256xf32>
    %24 = math.exp %23 : vector<16x256xf32>
    %cst_20 = arith.constant 1.000000e+00 : f32
    %25 = vector.broadcast %cst_20 : f32 to vector<16x256xf32>
    %26 = arith.addf %25, %24 : vector<16x256xf32>
    %27 = arith.divf %25, %26 : vector<16x256xf32>
    %28 = vector.extract_strided_slice %27 {offsets = [0, 0], sizes = [16, 128], strides = [1, 1]} : vector<16x256xf32> to vector<16x128xf32>
    %29 = vector.extract_strided_slice %27 {offsets = [0, 128], sizes = [16, 128], strides = [1, 1]} : vector<16x256xf32> to vector<16x128xf32>
    %30 = vector.extract_strided_slice %17 {offsets = [0, 256], sizes = [16, 128], strides = [1, 1]} : vector<16x384xf32> to vector<16x128xf32>
    %31 = vector.extract_strided_slice %19 {offsets = [0, 256], sizes = [16, 128], strides = [1, 1]} : vector<16x384xf32> to vector<16x128xf32>
    %32 = vector.broadcast %13 : vector<1x128xf32> to vector<16x128xf32>
    %33 = arith.addf %31, %32 : vector<16x128xf32>
    %34 = arith.mulf %28, %33 : vector<16x128xf32>
    %35 = arith.addf %30, %34 : vector<16x128xf32>
    %36 = math.tanh %35 : vector<16x128xf32>
    %37 = arith.subf %14, %36 : vector<16x128xf32>
    %38 = arith.mulf %29, %37 : vector<16x128xf32>
    %39 = arith.addf %36, %38 : vector<16x128xf32>
    %c1_i32 = arith.constant 1 : i32
    %40 = arith.index_cast %c1_i32 : i32 to index
    %c0_21 = arith.constant 0 : index
    %c0_22 = arith.constant 0 : index
    %41 = vector.load %arg11[%40, %c0_21, %c0_22] : memref<8x16x384xf32, #tpu.memory_space<vmem>>, vector<1x16x384xf32>
    %42 = vector.shape_cast %41 : vector<1x16x384xf32> to vector<16x384xf32>
    %43 = arith.truncf %39 : vector<16x128xf32> to vector<16x128xbf16>
    %cst_23 = arith.constant dense<0.000000e+00> : vector<16x384xf32>
    %44 = tpu.matmul %43, %12, %cst_23 {dimension_numbers = #tpu.dot_dimension_numbers<[1], [0], [0], [1], [0, 0, 1, 1], [], []>} : vector<16x128xbf16>, vector<128x384xbf16>, vector<16x384xf32> -> vector<16x384xf32>
    %45 = vector.extract_strided_slice %42 {offsets = [0, 0], sizes = [16, 256], strides = [1, 1]} : vector<16x384xf32> to vector<16x256xf32>
    %46 = vector.extract_strided_slice %44 {offsets = [0, 0], sizes = [16, 256], strides = [1, 1]} : vector<16x384xf32> to vector<16x256xf32>
    %47 = arith.addf %45, %46 : vector<16x256xf32>
    %48 = arith.negf %47 : vector<16x256xf32>
    %49 = math.exp %48 : vector<16x256xf32>
    %cst_24 = arith.constant 1.000000e+00 : f32
    %50 = vector.broadcast %cst_24 : f32 to vector<16x256xf32>
    %51 = arith.addf %50, %49 : vector<16x256xf32>
    %52 = arith.divf %50, %51 : vector<16x256xf32>
    %53 = vector.extract_strided_slice %52 {offsets = [0, 0], sizes = [16, 128], strides = [1, 1]} : vector<16x256xf32> to vector<16x128xf32>
    %54 = vector.extract_strided_slice %52 {offsets = [0, 128], sizes = [16, 128], strides = [1, 1]} : vector<16x256xf32> to vector<16x128xf32>
    %55 = vector.extract_strided_slice %42 {offsets = [0, 256], sizes = [16, 128], strides = [1, 1]} : vector<16x384xf32> to vector<16x128xf32>
    %56 = vector.extract_strided_slice %44 {offsets = [0, 256], sizes = [16, 128], strides = [1, 1]} : vector<16x384xf32> to vector<16x128xf32>
    %57 = vector.broadcast %13 : vector<1x128xf32> to vector<16x128xf32>
    %58 = arith.addf %56, %57 : vector<16x128xf32>
    %59 = arith.mulf %53, %58 : vector<16x128xf32>
    %60 = arith.addf %55, %59 : vector<16x128xf32>
    %61 = math.tanh %60 : vector<16x128xf32>
    %62 = arith.subf %39, %61 : vector<16x128xf32>
    %63 = arith.mulf %54, %62 : vector<16x128xf32>
    %64 = arith.addf %61, %63 : vector<16x128xf32>
    %c2_i32 = arith.constant 2 : i32
    %65 = arith.index_cast %c2_i32 : i32 to index
    %c0_25 = arith.constant 0 : index
    %c0_26 = arith.constant 0 : index
    %66 = vector.load %arg11[%65, %c0_25, %c0_26] : memref<8x16x384xf32, #tpu.memory_space<vmem>>, vector<1x16x384xf32>
    %67 = vector.shape_cast %66 : vector<1x16x384xf32> to vector<16x384xf32>
    %68 = arith.truncf %64 : vector<16x128xf32> to vector<16x128xbf16>
    %cst_27 = arith.constant dense<0.000000e+00> : vector<16x384xf32>
    %69 = tpu.matmul %68, %12, %cst_27 {dimension_numbers = #tpu.dot_dimension_numbers<[1], [0], [0], [1], [0, 0, 1, 1], [], []>} : vector<16x128xbf16>, vector<128x384xbf16>, vector<16x384xf32> -> vector<16x384xf32>
    %70 = vector.extract_strided_slice %67 {offsets = [0, 0], sizes = [16, 256], strides = [1, 1]} : vector<16x384xf32> to vector<16x256xf32>
    %71 = vector.extract_strided_slice %69 {offsets = [0, 0], sizes = [16, 256], strides = [1, 1]} : vector<16x384xf32> to vector<16x256xf32>
    %72 = arith.addf %70, %71 : vector<16x256xf32>
    %73 = arith.negf %72 : vector<16x256xf32>
    %74 = math.exp %73 : vector<16x256xf32>
    %cst_28 = arith.constant 1.000000e+00 : f32
    %75 = vector.broadcast %cst_28 : f32 to vector<16x256xf32>
    %76 = arith.addf %75, %74 : vector<16x256xf32>
    %77 = arith.divf %75, %76 : vector<16x256xf32>
    %78 = vector.extract_strided_slice %77 {offsets = [0, 0], sizes = [16, 128], strides = [1, 1]} : vector<16x256xf32> to vector<16x128xf32>
    %79 = vector.extract_strided_slice %77 {offsets = [0, 128], sizes = [16, 128], strides = [1, 1]} : vector<16x256xf32> to vector<16x128xf32>
    %80 = vector.extract_strided_slice %67 {offsets = [0, 256], sizes = [16, 128], strides = [1, 1]} : vector<16x384xf32> to vector<16x128xf32>
    %81 = vector.extract_strided_slice %69 {offsets = [0, 256], sizes = [16, 128], strides = [1, 1]} : vector<16x384xf32> to vector<16x128xf32>
    %82 = vector.broadcast %13 : vector<1x128xf32> to vector<16x128xf32>
    %83 = arith.addf %81, %82 : vector<16x128xf32>
    %84 = arith.mulf %78, %83 : vector<16x128xf32>
    %85 = arith.addf %80, %84 : vector<16x128xf32>
    %86 = math.tanh %85 : vector<16x128xf32>
    %87 = arith.subf %64, %86 : vector<16x128xf32>
    %88 = arith.mulf %79, %87 : vector<16x128xf32>
    %89 = arith.addf %86, %88 : vector<16x128xf32>
    %c3_i32 = arith.constant 3 : i32
    %90 = arith.index_cast %c3_i32 : i32 to index
    %c0_29 = arith.constant 0 : index
    %c0_30 = arith.constant 0 : index
    %91 = vector.load %arg11[%90, %c0_29, %c0_30] : memref<8x16x384xf32, #tpu.memory_space<vmem>>, vector<1x16x384xf32>
    %92 = vector.shape_cast %91 : vector<1x16x384xf32> to vector<16x384xf32>
    %93 = arith.truncf %89 : vector<16x128xf32> to vector<16x128xbf16>
    %cst_31 = arith.constant dense<0.000000e+00> : vector<16x384xf32>
    %94 = tpu.matmul %93, %12, %cst_31 {dimension_numbers = #tpu.dot_dimension_numbers<[1], [0], [0], [1], [0, 0, 1, 1], [], []>} : vector<16x128xbf16>, vector<128x384xbf16>, vector<16x384xf32> -> vector<16x384xf32>
    %95 = vector.extract_strided_slice %92 {offsets = [0, 0], sizes = [16, 256], strides = [1, 1]} : vector<16x384xf32> to vector<16x256xf32>
    %96 = vector.extract_strided_slice %94 {offsets = [0, 0], sizes = [16, 256], strides = [1, 1]} : vector<16x384xf32> to vector<16x256xf32>
    %97 = arith.addf %95, %96 : vector<16x256xf32>
    %98 = arith.negf %97 : vector<16x256xf32>
    %99 = math.exp %98 : vector<16x256xf32>
    %cst_32 = arith.constant 1.000000e+00 : f32
    %100 = vector.broadcast %cst_32 : f32 to vector<16x256xf32>
    %101 = arith.addf %100, %99 : vector<16x256xf32>
    %102 = arith.divf %100, %101 : vector<16x256xf32>
    %103 = vector.extract_strided_slice %102 {offsets = [0, 0], sizes = [16, 128], strides = [1, 1]} : vector<16x256xf32> to vector<16x128xf32>
    %104 = vector.extract_strided_slice %102 {offsets = [0, 128], sizes = [16, 128], strides = [1, 1]} : vector<16x256xf32> to vector<16x128xf32>
    %105 = vector.extract_strided_slice %92 {offsets = [0, 256], sizes = [16, 128], strides = [1, 1]} : vector<16x384xf32> to vector<16x128xf32>
    %106 = vector.extract_strided_slice %94 {offsets = [0, 256], sizes = [16, 128], strides = [1, 1]} : vector<16x384xf32> to vector<16x128xf32>
    %107 = vector.broadcast %13 : vector<1x128xf32> to vector<16x128xf32>
    %108 = arith.addf %106, %107 : vector<16x128xf32>
    %109 = arith.mulf %103, %108 : vector<16x128xf32>
    %110 = arith.addf %105, %109 : vector<16x128xf32>
    %111 = math.tanh %110 : vector<16x128xf32>
    %112 = arith.subf %89, %111 : vector<16x128xf32>
    %113 = arith.mulf %104, %112 : vector<16x128xf32>
    %114 = arith.addf %111, %113 : vector<16x128xf32>
    %c4_i32 = arith.constant 4 : i32
    %115 = arith.index_cast %c4_i32 : i32 to index
    %c0_33 = arith.constant 0 : index
    %c0_34 = arith.constant 0 : index
    %116 = vector.load %arg11[%115, %c0_33, %c0_34] : memref<8x16x384xf32, #tpu.memory_space<vmem>>, vector<1x16x384xf32>
    %117 = vector.shape_cast %116 : vector<1x16x384xf32> to vector<16x384xf32>
    %118 = arith.truncf %114 : vector<16x128xf32> to vector<16x128xbf16>
    %cst_35 = arith.constant dense<0.000000e+00> : vector<16x384xf32>
    %119 = tpu.matmul %118, %12, %cst_35 {dimension_numbers = #tpu.dot_dimension_numbers<[1], [0], [0], [1], [0, 0, 1, 1], [], []>} : vector<16x128xbf16>, vector<128x384xbf16>, vector<16x384xf32> -> vector<16x384xf32>
    %120 = vector.extract_strided_slice %117 {offsets = [0, 0], sizes = [16, 256], strides = [1, 1]} : vector<16x384xf32> to vector<16x256xf32>
    %121 = vector.extract_strided_slice %119 {offsets = [0, 0], sizes = [16, 256], strides = [1, 1]} : vector<16x384xf32> to vector<16x256xf32>
    %122 = arith.addf %120, %121 : vector<16x256xf32>
    %123 = arith.negf %122 : vector<16x256xf32>
    %124 = math.exp %123 : vector<16x256xf32>
    %cst_36 = arith.constant 1.000000e+00 : f32
    %125 = vector.broadcast %cst_36 : f32 to vector<16x256xf32>
    %126 = arith.addf %125, %124 : vector<16x256xf32>
    %127 = arith.divf %125, %126 : vector<16x256xf32>
    %128 = vector.extract_strided_slice %127 {offsets = [0, 0], sizes = [16, 128], strides = [1, 1]} : vector<16x256xf32> to vector<16x128xf32>
    %129 = vector.extract_strided_slice %127 {offsets = [0, 128], sizes = [16, 128], strides = [1, 1]} : vector<16x256xf32> to vector<16x128xf32>
    %130 = vector.extract_strided_slice %117 {offsets = [0, 256], sizes = [16, 128], strides = [1, 1]} : vector<16x384xf32> to vector<16x128xf32>
    %131 = vector.extract_strided_slice %119 {offsets = [0, 256], sizes = [16, 128], strides = [1, 1]} : vector<16x384xf32> to vector<16x128xf32>
    %132 = vector.broadcast %13 : vector<1x128xf32> to vector<16x128xf32>
    %133 = arith.addf %131, %132 : vector<16x128xf32>
    %134 = arith.mulf %128, %133 : vector<16x128xf32>
    %135 = arith.addf %130, %134 : vector<16x128xf32>
    %136 = math.tanh %135 : vector<16x128xf32>
    %137 = arith.subf %114, %136 : vector<16x128xf32>
    %138 = arith.mulf %129, %137 : vector<16x128xf32>
    %139 = arith.addf %136, %138 : vector<16x128xf32>
    %c5_i32 = arith.constant 5 : i32
    %140 = arith.index_cast %c5_i32 : i32 to index
    %c0_37 = arith.constant 0 : index
    %c0_38 = arith.constant 0 : index
    %141 = vector.load %arg11[%140, %c0_37, %c0_38] : memref<8x16x384xf32, #tpu.memory_space<vmem>>, vector<1x16x384xf32>
    %142 = vector.shape_cast %141 : vector<1x16x384xf32> to vector<16x384xf32>
    %143 = arith.truncf %139 : vector<16x128xf32> to vector<16x128xbf16>
    %cst_39 = arith.constant dense<0.000000e+00> : vector<16x384xf32>
    %144 = tpu.matmul %143, %12, %cst_39 {dimension_numbers = #tpu.dot_dimension_numbers<[1], [0], [0], [1], [0, 0, 1, 1], [], []>} : vector<16x128xbf16>, vector<128x384xbf16>, vector<16x384xf32> -> vector<16x384xf32>
    %145 = vector.extract_strided_slice %142 {offsets = [0, 0], sizes = [16, 256], strides = [1, 1]} : vector<16x384xf32> to vector<16x256xf32>
    %146 = vector.extract_strided_slice %144 {offsets = [0, 0], sizes = [16, 256], strides = [1, 1]} : vector<16x384xf32> to vector<16x256xf32>
    %147 = arith.addf %145, %146 : vector<16x256xf32>
    %148 = arith.negf %147 : vector<16x256xf32>
    %149 = math.exp %148 : vector<16x256xf32>
    %cst_40 = arith.constant 1.000000e+00 : f32
    %150 = vector.broadcast %cst_40 : f32 to vector<16x256xf32>
    %151 = arith.addf %150, %149 : vector<16x256xf32>
    %152 = arith.divf %150, %151 : vector<16x256xf32>
    %153 = vector.extract_strided_slice %152 {offsets = [0, 0], sizes = [16, 128], strides = [1, 1]} : vector<16x256xf32> to vector<16x128xf32>
    %154 = vector.extract_strided_slice %152 {offsets = [0, 128], sizes = [16, 128], strides = [1, 1]} : vector<16x256xf32> to vector<16x128xf32>
    %155 = vector.extract_strided_slice %142 {offsets = [0, 256], sizes = [16, 128], strides = [1, 1]} : vector<16x384xf32> to vector<16x128xf32>
    %156 = vector.extract_strided_slice %144 {offsets = [0, 256], sizes = [16, 128], strides = [1, 1]} : vector<16x384xf32> to vector<16x128xf32>
    %157 = vector.broadcast %13 : vector<1x128xf32> to vector<16x128xf32>
    %158 = arith.addf %156, %157 : vector<16x128xf32>
    %159 = arith.mulf %153, %158 : vector<16x128xf32>
    %160 = arith.addf %155, %159 : vector<16x128xf32>
    %161 = math.tanh %160 : vector<16x128xf32>
    %162 = arith.subf %139, %161 : vector<16x128xf32>
    %163 = arith.mulf %154, %162 : vector<16x128xf32>
    %164 = arith.addf %161, %163 : vector<16x128xf32>
    %c6_i32 = arith.constant 6 : i32
    %165 = arith.index_cast %c6_i32 : i32 to index
    %c0_41 = arith.constant 0 : index
    %c0_42 = arith.constant 0 : index
    %166 = vector.load %arg11[%165, %c0_41, %c0_42] : memref<8x16x384xf32, #tpu.memory_space<vmem>>, vector<1x16x384xf32>
    %167 = vector.shape_cast %166 : vector<1x16x384xf32> to vector<16x384xf32>
    %168 = arith.truncf %164 : vector<16x128xf32> to vector<16x128xbf16>
    %cst_43 = arith.constant dense<0.000000e+00> : vector<16x384xf32>
    %169 = tpu.matmul %168, %12, %cst_43 {dimension_numbers = #tpu.dot_dimension_numbers<[1], [0], [0], [1], [0, 0, 1, 1], [], []>} : vector<16x128xbf16>, vector<128x384xbf16>, vector<16x384xf32> -> vector<16x384xf32>
    %170 = vector.extract_strided_slice %167 {offsets = [0, 0], sizes = [16, 256], strides = [1, 1]} : vector<16x384xf32> to vector<16x256xf32>
    %171 = vector.extract_strided_slice %169 {offsets = [0, 0], sizes = [16, 256], strides = [1, 1]} : vector<16x384xf32> to vector<16x256xf32>
    %172 = arith.addf %170, %171 : vector<16x256xf32>
    %173 = arith.negf %172 : vector<16x256xf32>
    %174 = math.exp %173 : vector<16x256xf32>
    %cst_44 = arith.constant 1.000000e+00 : f32
    %175 = vector.broadcast %cst_44 : f32 to vector<16x256xf32>
    %176 = arith.addf %175, %174 : vector<16x256xf32>
    %177 = arith.divf %175, %176 : vector<16x256xf32>
    %178 = vector.extract_strided_slice %177 {offsets = [0, 0], sizes = [16, 128], strides = [1, 1]} : vector<16x256xf32> to vector<16x128xf32>
    %179 = vector.extract_strided_slice %177 {offsets = [0, 128], sizes = [16, 128], strides = [1, 1]} : vector<16x256xf32> to vector<16x128xf32>
    %180 = vector.extract_strided_slice %167 {offsets = [0, 256], sizes = [16, 128], strides = [1, 1]} : vector<16x384xf32> to vector<16x128xf32>
    %181 = vector.extract_strided_slice %169 {offsets = [0, 256], sizes = [16, 128], strides = [1, 1]} : vector<16x384xf32> to vector<16x128xf32>
    %182 = vector.broadcast %13 : vector<1x128xf32> to vector<16x128xf32>
    %183 = arith.addf %181, %182 : vector<16x128xf32>
    %184 = arith.mulf %178, %183 : vector<16x128xf32>
    %185 = arith.addf %180, %184 : vector<16x128xf32>
    %186 = math.tanh %185 : vector<16x128xf32>
    %187 = arith.subf %164, %186 : vector<16x128xf32>
    %188 = arith.mulf %179, %187 : vector<16x128xf32>
    %189 = arith.addf %186, %188 : vector<16x128xf32>
    %c7_i32 = arith.constant 7 : i32
    %190 = arith.index_cast %c7_i32 : i32 to index
    %c0_45 = arith.constant 0 : index
    %c0_46 = arith.constant 0 : index
    %191 = vector.load %arg11[%190, %c0_45, %c0_46] : memref<8x16x384xf32, #tpu.memory_space<vmem>>, vector<1x16x384xf32>
    %192 = vector.shape_cast %191 : vector<1x16x384xf32> to vector<16x384xf32>
    %193 = arith.truncf %189 : vector<16x128xf32> to vector<16x128xbf16>
    %cst_47 = arith.constant dense<0.000000e+00> : vector<16x384xf32>
    %194 = tpu.matmul %193, %12, %cst_47 {dimension_numbers = #tpu.dot_dimension_numbers<[1], [0], [0], [1], [0, 0, 1, 1], [], []>} : vector<16x128xbf16>, vector<128x384xbf16>, vector<16x384xf32> -> vector<16x384xf32>
    %195 = vector.extract_strided_slice %192 {offsets = [0, 0], sizes = [16, 256], strides = [1, 1]} : vector<16x384xf32> to vector<16x256xf32>
    %196 = vector.extract_strided_slice %194 {offsets = [0, 0], sizes = [16, 256], strides = [1, 1]} : vector<16x384xf32> to vector<16x256xf32>
    %197 = arith.addf %195, %196 : vector<16x256xf32>
    %198 = arith.negf %197 : vector<16x256xf32>
    %199 = math.exp %198 : vector<16x256xf32>
    %cst_48 = arith.constant 1.000000e+00 : f32
    %200 = vector.broadcast %cst_48 : f32 to vector<16x256xf32>
    %201 = arith.addf %200, %199 : vector<16x256xf32>
    %202 = arith.divf %200, %201 : vector<16x256xf32>
    %203 = vector.extract_strided_slice %202 {offsets = [0, 0], sizes = [16, 128], strides = [1, 1]} : vector<16x256xf32> to vector<16x128xf32>
    %204 = vector.extract_strided_slice %202 {offsets = [0, 128], sizes = [16, 128], strides = [1, 1]} : vector<16x256xf32> to vector<16x128xf32>
    %205 = vector.extract_strided_slice %192 {offsets = [0, 256], sizes = [16, 128], strides = [1, 1]} : vector<16x384xf32> to vector<16x128xf32>
    %206 = vector.extract_strided_slice %194 {offsets = [0, 256], sizes = [16, 128], strides = [1, 1]} : vector<16x384xf32> to vector<16x128xf32>
    %207 = vector.broadcast %13 : vector<1x128xf32> to vector<16x128xf32>
    %208 = arith.addf %206, %207 : vector<16x128xf32>
    %209 = arith.mulf %203, %208 : vector<16x128xf32>
    %210 = arith.addf %205, %209 : vector<16x128xf32>
    %211 = math.tanh %210 : vector<16x128xf32>
    %212 = arith.subf %189, %211 : vector<16x128xf32>
    %213 = arith.mulf %204, %212 : vector<16x128xf32>
    %214 = arith.addf %211, %213 : vector<16x128xf32>
    %c8_i32 = arith.constant 8 : i32
    %c0_49 = arith.constant 0 : index
    %c0_50 = arith.constant 0 : index
    %215 = vector.load %arg10[%c0_49, %c0_50] : memref<16x128xf32, #tpu.memory_space<vmem>>, vector<16x128xf32>
    tpu.vector_store %arg10[%c0_49, %c0_50], %214 {strides = array<i32>} : memref<16x128xf32, #tpu.memory_space<vmem>>, vector<16x128xf32>,
    %c0_i32_51 = arith.constant 0 : i32
    %216 = arith.cmpi eq, %arg1, %c0_i32_51 : i32
    %217 = arith.extui %216 : i1 to i32
    %c0_i32_52 = arith.constant 0 : i32
    %218 = arith.cmpi ne, %217, %c0_i32_52 : i32
    scf.if %218 {
      %219 = arith.truncf %214 : vector<16x128xf32> to vector<16x128xbf16>
      %c0_53 = arith.constant 0 : index
      %c0_54 = arith.constant 0 : index
      %220 = vector.load %arg7[%c0_53, %c0_54] : memref<128x128xbf16, #tpu.memory_space<vmem>>, vector<128x128xbf16>
      %cst_55 = arith.constant dense<0.000000e+00> : vector<16x128xf32>
      %221 = tpu.matmul %219, %220, %cst_55 {dimension_numbers = #tpu.dot_dimension_numbers<[1], [0], [0], [1], [0, 0, 1, 1], [], []>} : vector<16x128xbf16>, vector<128x128xbf16>, vector<16x128xf32> -> vector<16x128xf32>
      %c0_56 = arith.constant 0 : index
      %c0_57 = arith.constant 0 : index
      %222 = vector.load %arg8[%c0_56, %c0_57] : memref<1x128xf32, #tpu.memory_space<vmem>>, vector<1x128xf32>
      %223 = vector.broadcast %222 : vector<1x128xf32> to vector<16x128xf32>
      %224 = arith.addf %221, %223 : vector<16x128xf32>
      %c0_58 = arith.constant 0 : index
      %c0_59 = arith.constant 0 : index
      %225 = vector.load %arg9[%c0_58, %c0_59] : memref<16x128xf32, #tpu.memory_space<vmem>>, vector<16x128xf32>
      tpu.vector_store %arg9[%c0_58, %c0_59], %224 {strides = array<i32>} : memref<16x128xf32, #tpu.memory_space<vmem>>, vector<16x128xf32>,
    } else {
    }
    return
  }
  func.func @transform_0(%arg0: i32, %arg1: i32) -> (i32, i32, i32) {
    %c0_i32 = arith.constant 0 : i32
    %c0_i32_0 = arith.constant 0 : i32
    return %arg1, %arg0, %c0_i32 : i32, i32, i32
  }
  func.func @transform_1(%arg0: i32, %arg1: i32) -> (i32, i32) {
    %c0_i32 = arith.constant 0 : i32
    %c0_i32_0 = arith.constant 0 : i32
    %c0_i32_1 = arith.constant 0 : i32
    return %c0_i32, %c0_i32_0 : i32, i32
  }
  func.func @transform_2(%arg0: i32, %arg1: i32) -> (i32, i32) {
    %c0_i32 = arith.constant 0 : i32
    %c0_i32_0 = arith.constant 0 : i32
    %c0_i32_1 = arith.constant 0 : i32
    return %c0_i32, %c0_i32_0 : i32, i32
  }
  func.func @transform_3(%arg0: i32, %arg1: i32) -> (i32, i32) {
    %c0_i32 = arith.constant 0 : i32
    %c0_i32_0 = arith.constant 0 : i32
    %c0_i32_1 = arith.constant 0 : i32
    return %c0_i32, %c0_i32_0 : i32, i32
  }
  func.func @transform_4(%arg0: i32, %arg1: i32) -> (i32, i32) {
    %c0_i32 = arith.constant 0 : i32
    %c0_i32_0 = arith.constant 0 : i32
    %c0_i32_1 = arith.constant 0 : i32
    return %c0_i32, %c0_i32_0 : i32, i32
  }
  func.func @transform_5(%arg0: i32, %arg1: i32) -> (i32, i32) {
    %c0_i32 = arith.constant 0 : i32
    %c0_i32_0 = arith.constant 0 : i32
    %c0_i32_1 = arith.constant 0 : i32
    return %c0_i32, %c0_i32_0 : i32, i32
  }
  func.func @transform_6(%arg0: i32, %arg1: i32) -> (i32, i32) {
    %c0_i32 = arith.constant 0 : i32
    %c0_i32_0 = arith.constant 0 : i32
    %c0_i32_1 = arith.constant 0 : i32
    return %c0_i32, %c0_i32_0 : i32, i32
  }
  func.func @transform_7(%arg0: i32, %arg1: i32) -> (i32, i32) {
    %c0_i32 = arith.constant 0 : i32
    %c0_i32_0 = arith.constant 0 : i32
    return %arg0, %c0_i32 : i32, i32
  }
}

</mosaic_0001>

<llo_original>
// kernel: tpu_custom_call.1
$region0: #{tpu_custom_call.1}
  #allocation0 [shape = 'u32[]', space=smem, size = 0x4, offset = 0x4, fixed_abs, tag = 'smem constant byte address 0x4 - core index']
  #allocation1 [shape = 'u32[144,128]{1,0:T(1,128)}', space=vmem, size = 0x12000, scoped, tag = 'internal scratch']
  #allocation2 [shape = 'f32[16,128]{1,0:T(8,128)}', space=vmem, size = 0x2000, scoped, tag = 'scratch operand']
  #allocation3 [shape = 'f32[8,16,384]{2,1,0:T(8,128)}', space=vmem, size = 0x30000, scoped, tag = 'scratch operand']
  %s0 = inlined_call_operand.vmem [shape: bf16[8,16,4], index: 0, kind: input, shape index: {}]
  %s1 = inlined_call_operand.vmem [shape: bf16[4,384], index: 1, kind: input, shape index: {}]
  %s2 = inlined_call_operand.vmem [shape: f32[1,384], index: 2, kind: input, shape index: {}]
  %s3 = inlined_call_operand.hbm [shape: bf16[128,384], index: 3, kind: input, shape index: {}]
  %s4 = inlined_call_operand.vmem [shape: f32[1,128], index: 4, kind: input, shape index: {}]
  %s5 = inlined_call_operand.vmem [shape: bf16[128,128], index: 5, kind: input, shape index: {}]
  %s6 = inlined_call_operand.vmem [shape: f32[1,128], index: 6, kind: input, shape index: {}]
  %s7 = inlined_call_operand.hbm [shape: f32[16,128], index: 7, kind: output, shape index: {}]
  %s8 = sld [smem:[#allocation0]]
  $region50: #{tpu_custom_call.1} parent=0
    _
  %s10 = ssub.s32 1, %s8
  %s11 = scalar_select 0, %s10, %s8
  $region1: #{tpu_custom_call.1} parent=0
    #allocation4 [shape = 'u8[98304]{0}', space=vmem, size = 0x18000, scoped, tag = 'input window, operand 3, single buffered']
    #allocation5 [shape = 's32[1]{0}', space=sflag, size = 0x4, scoped, tag = 'scoped memory for tpu_custom_call.1']
    #allocation6 [shape = 's32[1]{0}', space=sflag, size = 0x4, scoped, tag = 'scoped memory for tpu_custom_call.1']
    #allocation7 [shape = 'u8[8192]{0}', space=vmem, size = 0x2000, scoped, tag = 'output window, operand 0, single buffered']
    %12 = vsyncpa [#allocation5], 0
    %13 = vsyncpa [#allocation6], 0
    // Predicated region
    $region2: #{tpu_custom_call.1} parent=1 // pred_check
      _
    $region3: #{tpu_custom_call.1} parent=1 // pred_check_branch
      %15 = sbr.rel (0) target = $region5
    $region4: #{tpu_custom_call.1} parent=1 // pred_region
      _
    $region5: #{tpu_custom_call.1} parent=1 // pred_fallthru
      _
    // Predicated region
    $region6: #{tpu_custom_call.1} parent=1 // pred_check
      _
    $region7: #{tpu_custom_call.1} parent=1 // pred_check_branch
      %17 = sbr.rel (0) target = $region9
    $region8: #{tpu_custom_call.1} parent=1 // pred_region
      _
    $region9: #{tpu_custom_call.1} parent=1 // pred_fallthru
      _
    // Predicated region
    $region10: #{tpu_custom_call.1} parent=1 // pred_check
      _
    $region11: #{tpu_custom_call.1} parent=1 // pred_check_branch
      %19 = sbr.rel (0) target = $region13
    $region12: #{tpu_custom_call.1} parent=1 // pred_region
      _
    $region13: #{tpu_custom_call.1} parent=1 // pred_fallthru
      _
    // Predicated region
    $region14: #{tpu_custom_call.1} parent=1 // pred_check
      _
    $region15: #{tpu_custom_call.1} parent=1 // pred_check_branch
      %21 = sbr.rel (0) target = $region17
    $region16: #{tpu_custom_call.1} parent=1 // pred_region
      %s23 = ssub.s32 3072, 3072
      %24 = vsyncadd [#allocation5], %s23
      %s25 = sshll.u32 [#allocation4], 4
      %s26 = int_to_ptr.vmem [resolvable:$true] %s25
      %31 = dma.hbm_to_vmem [thread:$0]  %s3, 3072, %s26, [#allocation5], 192, 192, 12
    $region17: #{tpu_custom_call.1} parent=1 // pred_fallthru
      _
    // Predicated region
    $region18: #{tpu_custom_call.1} parent=1 // pred_check
      _
    $region19: #{tpu_custom_call.1} parent=1 // pred_check_branch
      %33 = sbr.rel (0) target = $region21
    $region20: #{tpu_custom_call.1} parent=1 // pred_region
      _
    $region21: #{tpu_custom_call.1} parent=1 // pred_fallthru
      _
    // Predicated region
    $region22: #{tpu_custom_call.1} parent=1 // pred_check
      _
    $region23: #{tpu_custom_call.1} parent=1 // pred_check_branch
      %35 = sbr.rel (0) target = $region25
    $region24: #{tpu_custom_call.1} parent=1 // pred_region
      _
    $region25: #{tpu_custom_call.1} parent=1 // pred_fallthru
      _
    // Predicated region
    $region26: #{tpu_custom_call.1} parent=1 // pred_check
      _
    $region27: #{tpu_custom_call.1} parent=1 // pred_check_branch
      %37 = sbr.rel (0) target = $region29
    $region28: #{tpu_custom_call.1} parent=1 // pred_region
      _
    $region29: #{tpu_custom_call.1} parent=1 // pred_fallthru
      _
    // Predicated region
    $region30: #{tpu_custom_call.1} parent=1 // pred_check
      _
    $region31: #{tpu_custom_call.1} parent=1 // pred_check_branch
      %39 = sbr.rel (0) target = $region33
    $region32: #{tpu_custom_call.1} parent=1 // pred_region
      %40 = dma.done [#allocation5], 3072
    $region33: #{tpu_custom_call.1} parent=1 // pred_fallthru
      _
    %p42 = scmp.eq.s32.totalorder 0, 0
    // Predicated region
    $region34: #{tpu_custom_call.1} parent=1 // pred_check
      %p43 = pneg %p42
    $region35: #{tpu_custom_call.1} parent=1 // pred_check_branch
      %45 = sbr.rel (%p43) target = $region37
    $region36: #{tpu_custom_call.1} parent=1 // pred_region
      %46 = vst [vmem:[#allocation2] sm:$0xff] 0.0
      %47 = vst [vmem:[#allocation2 + $0x8] sm:$0xff] 0.0
    $region37: #{tpu_custom_call.1} parent=1 // pred_fallthru
      _
    %v48 = vld [vmem:[%s0] sm:$0xf]
    %v49 = vld [vmem:[%s0 + $0x4] sm:$0xf]
    %v50 = vld [vmem:[%s0 + $0x8] sm:$0xf]
    %v51 = vld [vmem:[%s0 + $0xc] sm:$0xf]
    %v52 = vld [vmem:[%s0 + $0x10] sm:$0xf]
    %v53 = vld [vmem:[%s0 + $0x14] sm:$0xf]
    %v54 = vld [vmem:[%s0 + $0x18] sm:$0xf]
    %v55 = vld [vmem:[%s0 + $0x1c] sm:$0xf]
    %v56 = vld [vmem:[%s0 + $0x20] sm:$0xf]
    %v57 = vld [vmem:[%s0 + $0x24] sm:$0xf]
    %v58 = vld [vmem:[%s0 + $0x28] sm:$0xf]
    %v59 = vld [vmem:[%s0 + $0x2c] sm:$0xf]
    %v60 = vld [vmem:[%s0 + $0x30] sm:$0xf]
    %v61 = vld [vmem:[%s0 + $0x34] sm:$0xf]
    %v62 = vld [vmem:[%s0 + $0x38] sm:$0xf]
    %v63 = vld [vmem:[%s0 + $0x3c] sm:$0xf]
    %v64 = vld [vmem:[%s1] sm:$0x3f]
    %v65 = vld [vmem:[%s2] sm:$0x7]
    %v67 = vlaneseq
    %v68 = vshrl.u32 %v67, 7
    %v69 = vsub.s32 0, %v68
    %v70 = vrot.slane %v65, %v69
    %v71 = vlaneseq
    %v72 = vshrl.u32 %v71, 7
    %v73 = vsub.s32 1, %v72
    %v74 = vrot.slane %v65, %v73
    %v75 = vlaneseq
    %v76 = vshrl.u32 %v75, 7
    %v77 = vsub.s32 2, %v76
    %v78 = vrot.slane %v65, %v77
    %v98 = vunpack.c.l.b16 %v48
    %v99 = vunpack.c.l.b16 %v49
    %v100 = vunpack.c.l.b16 %v50
    %v101 = vunpack.c.l.b16 %v51
    %v102 = vunpack.c.l.b16 %v52
    %v103 = vunpack.c.l.b16 %v53
    %v104 = vunpack.c.l.b16 %v54
    %v105 = vunpack.c.l.b16 %v55
    %v106 = vunpack.c.l.b16 %v56
    %v107 = vunpack.c.l.b16 %v57
    %v108 = vunpack.c.l.b16 %v58
    %v109 = vunpack.c.l.b16 %v59
    %v110 = vunpack.c.l.b16 %v60
    %v111 = vunpack.c.l.b16 %v61
    %v112 = vunpack.c.l.b16 %v62
    %v113 = vunpack.c.l.b16 %v63
    %v114 = vpack.c.b16 %v99, %v98
    %v115 = vpack.c.b16 %v101, %v100
    %v116 = vpack.c.b16 %v103, %v102
    %v117 = vpack.c.b16 %v105, %v104
    %v118 = vpack.c.b16 %v107, %v106
    %v119 = vpack.c.b16 %v109, %v108
    %v120 = vpack.c.b16 %v111, %v110
    %v121 = vpack.c.b16 %v113, %v112
    %v123 = vcombine.high %v64, %v64
    %v125 = vunpack.c.l.s4 1983009808
    %v126 = vunpack.c.0.s8 %v125
    %v127 = vlaneseq
    %v128 = vshrl.u32 %v127, 7
    %v129 = vsub.s32 %v126, %v128
    %v130 = vrot.slane %v64, %v129
    %v132 = vunpack.c.l.s4 1983009808
    %v133 = vunpack.c.0.s8 %v132
    %v134 = vlaneseq
    %v135 = vshrl.u32 %v134, 7
    %v136 = vsub.s32 %v133, %v135
    %v137 = vrot.slane %v123, %v136
    %v138 = vcombine.high %v130, %v130
    %vm139 = vcmask 31744
    %v141 = vsel %vm139, %v114, 0
    %v144 = vsel %vm139, %v115, 0
    %v147 = vsel %vm139, %v116, 0
    %v150 = vsel %vm139, %v117, 0
    %v153 = vsel %vm139, %v118, 0
    %v156 = vsel %vm139, %v119, 0
    %v159 = vsel %vm139, %v120, 0
    %v162 = vsel %vm139, %v121, 0
    %vm164 = vcmask 1041408
    %v166 = vsel %vm164, %v130, 0
    %v169 = vsel %vm164, %v138, 0
    %v172 = vsel %vm164, %v137, 0
    %174 = vmatprep.subr.bf16.mxu0 %v169
    %175 = vmatpush1.bf16.msra.mxu0 %v166
    %176 = vmatprep.subr.bf16.mxu0 0
    %177 = vmatpush1.bf16.msra.mxu0 0
    %178 = vmatprep.subr.bf16.mxu0 0
    %179 = vmatpush1.bf16.msra.mxu0 0
    %180 = vmatprep.subr.bf16.mxu0 0
    %181 = vmatpush1.bf16.msra.mxu0 0
    %182 = vmatprep.subr.bf16.mxu0 0
    %183 = vmatpush1.bf16.msra.mxu0 0
    %184 = vmatprep.subr.bf16.mxu0 0
    %185 = vmatpush1.bf16.msra.mxu0 0
    %186 = vmatprep.subr.bf16.mxu0 0
    %187 = vmatpush1.bf16.msra.mxu0 0
    %188 = vmatprep.subr.bf16.mxu0 0
    %189 = vmatpush1.bf16.msra.mxu0 0
    %190 = vmatprep.subr.bf16.mxu0 0
    %191 = vmatpush1.bf16.msra.mxu0 0
    %192 = vmatprep.subr.bf16.mxu0 0
    %193 = vmatpush1.bf16.msra.mxu0 0
    %194 = vmatprep.subr.bf16.mxu0 0
    %195 = vmatpush1.bf16.msra.mxu0 0
    %196 = vmatprep.subr.bf16.mxu0 0
    %197 = vmatpush1.bf16.msra.mxu0 0
    %198 = vmatprep.subr.bf16.mxu0 0
    %199 = vmatpush1.bf16.msra.mxu0 0
    %200 = vmatprep.subr.bf16.mxu0 0
    %201 = vmatpush1.bf16.msra.mxu0 0
    %202 = vmatprep.subr.bf16.mxu0 0
    %203 = vmatpush1.bf16.msra.mxu0 0
    %204 = vmatprep.subr.bf16.mxu0 0
    %205 = vmatpush1.bf16.msra.mxu0 0
    %206 = vmatprep.mubr.bf16.mxu0 0
    %207 = vmatmul.mubr.bf16.gmra.mrb[0].mxu0 %v141
    %v208 = vpop.f32.mrb[0].mxu0
    %v209 = vadd.f32 %v70, %v208
    %v210 = vpop.f32.mrb[0].mxu0
    %v211 = vadd.f32 %v74, %v210
    %v212 = vpop.f32.mrb[0].mxu0
    %v213 = vadd.f32 %v70, %v212
    %v214 = vpop.f32.mrb[0].mxu0
    %v215 = vadd.f32 %v74, %v214
    %216 = vmatprep.mubr.bf16.mxu0 0
    %217 = vmatmul.mubr.bf16.gmra.mrb[0].mxu0 %v144
    %v218 = vpop.f32.mrb[0].mxu0
    %v219 = vadd.f32 %v70, %v218
    %v220 = vpop.f32.mrb[0].mxu0
    %v221 = vadd.f32 %v74, %v220
    %v222 = vpop.f32.mrb[0].mxu0
    %v223 = vadd.f32 %v70, %v222
    %v224 = vpop.f32.mrb[0].mxu0
    %v225 = vadd.f32 %v74, %v224
    %226 = vmatprep.mubr.bf16.mxu0 0
    %227 = vmatmul.mubr.bf16.gmra.mrb[0].mxu0 %v147
    %v228 = vpop.f32.mrb[0].mxu0
    %v229 = vadd.f32 %v70, %v228
    %v230 = vpop.f32.mrb[0].mxu0
    %v231 = vadd.f32 %v74, %v230
    %v232 = vpop.f32.mrb[0].mxu0
    %v233 = vadd.f32 %v70, %v232
    %v234 = vpop.f32.mrb[0].mxu0
    %v235 = vadd.f32 %v74, %v234
    %236 = vmatprep.mubr.bf16.mxu0 0
    %237 = vmatmul.mubr.bf16.gmra.mrb[0].mxu0 %v150
    %v238 = vpop.f32.mrb[0].mxu0
    %v239 = vadd.f32 %v70, %v238
    %v240 = vpop.f32.mrb[0].mxu0
    %v241 = vadd.f32 %v74, %v240
    %v242 = vpop.f32.mrb[0].mxu0
    %v243 = vadd.f32 %v70, %v242
    %v244 = vpop.f32.mrb[0].mxu0
    %v245 = vadd.f32 %v74, %v244
    %246 = vmatprep.mubr.bf16.mxu0 0
    %247 = vmatmul.mubr.bf16.gmra.mrb[0].mxu0 %v153
    %v248 = vpop.f32.mrb[0].mxu0
    %v249 = vadd.f32 %v70, %v248
    %v250 = vpop.f32.mrb[0].mxu0
    %v251 = vadd.f32 %v74, %v250
    %v252 = vpop.f32.mrb[0].mxu0
    %v253 = vadd.f32 %v70, %v252
    %v254 = vpop.f32.mrb[0].mxu0
    %v255 = vadd.f32 %v74, %v254
    %256 = vmatprep.mubr.bf16.mxu0 0
    %257 = vmatmul.mubr.bf16.gmra.mrb[0].mxu0 %v156
    %v258 = vpop.f32.mrb[0].mxu0
    %v259 = vadd.f32 %v70, %v258
    %v260 = vpop.f32.mrb[0].mxu0
    %v261 = vadd.f32 %v74, %v260
    %v262 = vpop.f32.mrb[0].mxu0
    %v263 = vadd.f32 %v70, %v262
    %v264 = vpop.f32.mrb[0].mxu0
    %v265 = vadd.f32 %v74, %v264
    %266 = vmatprep.mubr.bf16.mxu0 0
    %267 = vmatmul.mubr.bf16.gmra.mrb[0].mxu0 %v159
    %v268 = vpop.f32.mrb[0].mxu0
    %v269 = vadd.f32 %v70, %v268
    %v270 = vpop.f32.mrb[0].mxu0
    %v271 = vadd.f32 %v74, %v270
    %v272 = vpop.f32.mrb[0].mxu0
    %v273 = vadd.f32 %v70, %v272
    %v274 = vpop.f32.mrb[0].mxu0
    %v275 = vadd.f32 %v74, %v274
    %276 = vmatprep.mubr.bf16.mxu0 0
    %277 = vmatmul.mubr.bf16.gmra.mrb[0].mxu0 %v162
    %v278 = vpop.f32.mrb[0].mxu0
    %v279 = vadd.f32 %v70, %v278
    %v280 = vpop.f32.mrb[0].mxu0
    %v281 = vadd.f32 %v74, %v280
    %v282 = vpop.f32.mrb[0].mxu0
    %v283 = vadd.f32 %v70, %v282
    %v284 = vpop.f32.mrb[0].mxu0
    %v285 = vadd.f32 %v74, %v284
    %286 = vdwg.mxu0
    %287 = vmatprep.subr.bf16.mxu0 0
    %288 = vmatpush1.bf16.msra.mxu0 %v172
    %289 = vmatprep.subr.bf16.mxu0 0
    %290 = vmatpush1.bf16.msra.mxu0 0
    %291 = vmatprep.subr.bf16.mxu0 0
    %292 = vmatpush1.bf16.msra.mxu0 0
    %293 = vmatprep.subr.bf16.mxu0 0
    %294 = vmatpush1.bf16.msra.mxu0 0
    %295 = vmatprep.subr.bf16.mxu0 0
    %296 = vmatpush1.bf16.msra.mxu0 0
    %297 = vmatprep.subr.bf16.mxu0 0
    %298 = vmatpush1.bf16.msra.mxu0 0
    %299 = vmatprep.subr.bf16.mxu0 0
    %300 = vmatpush1.bf16.msra.mxu0 0
    %301 = vmatprep.subr.bf16.mxu0 0
    %302 = vmatpush1.bf16.msra.mxu0 0
    %303 = vmatprep.subr.bf16.mxu0 0
    %304 = vmatpush1.bf16.msra.mxu0 0
    %305 = vmatprep.subr.bf16.mxu0 0
    %306 = vmatpush1.bf16.msra.mxu0 0
    %307 = vmatprep.subr.bf16.mxu0 0
    %308 = vmatpush1.bf16.msra.mxu0 0
    %309 = vmatprep.subr.bf16.mxu0 0
    %310 = vmatpush1.bf16.msra.mxu0 0
    %311 = vmatprep.subr.bf16.mxu0 0
    %312 = vmatpush1.bf16.msra.mxu0 0
    %313 = vmatprep.subr.bf16.mxu0 0
    %314 = vmatpush1.bf16.msra.mxu0 0
    %315 = vmatprep.subr.bf16.mxu0 0
    %316 = vmatpush1.bf16.msra.mxu0 0
    %317 = vmatprep.subr.bf16.mxu0 0
    %318 = vmatpush1.bf16.msra.mxu0 0
    %319 = vmatprep.mubr.bf16.mxu0 0
    %320 = vmatmul.mubr.bf16.gmra.mrb[0].mxu0 %v141
    %v321 = vpop.f32.mrb[0].mxu0
    %v322 = vadd.f32 %v78, %v321
    %v323 = vpop.f32.mrb[0].mxu0
    %v324 = vpop.f32.mrb[0].mxu0
    %v325 = vadd.f32 %v78, %v324
    %v326 = vpop.f32.mrb[0].mxu0
    %327 = vmatprep.mubr.bf16.mxu0 0
    %328 = vmatmul.mubr.bf16.gmra.mrb[0].mxu0 %v144
    %v329 = vpop.f32.mrb[0].mxu0
    %v330 = vadd.f32 %v78, %v329
    %v331 = vpop.f32.mrb[0].mxu0
    %v332 = vpop.f32.mrb[0].mxu0
    %v333 = vadd.f32 %v78, %v332
    %v334 = vpop.f32.mrb[0].mxu0
    %335 = vmatprep.mubr.bf16.mxu0 0
    %336 = vmatmul.mubr.bf16.gmra.mrb[0].mxu0 %v147
    %v337 = vpop.f32.mrb[0].mxu0
    %v338 = vadd.f32 %v78, %v337
    %v339 = vpop.f32.mrb[0].mxu0
    %v340 = vpop.f32.mrb[0].mxu0
    %v341 = vadd.f32 %v78, %v340
    %v342 = vpop.f32.mrb[0].mxu0
    %343 = vmatprep.mubr.bf16.mxu0 0
    %344 = vmatmul.mubr.bf16.gmra.mrb[0].mxu0 %v150
    %v345 = vpop.f32.mrb[0].mxu0
    %v346 = vadd.f32 %v78, %v345
    %v347 = vpop.f32.mrb[0].mxu0
    %v348 = vpop.f32.mrb[0].mxu0
    %v349 = vadd.f32 %v78, %v348
    %v350 = vpop.f32.mrb[0].mxu0
    %351 = vmatprep.mubr.bf16.mxu0 0
    %352 = vmatmul.mubr.bf16.gmra.mrb[0].mxu0 %v153
    %v353 = vpop.f32.mrb[0].mxu0
    %v354 = vadd.f32 %v78, %v353
    %v355 = vpop.f32.mrb[0].mxu0
    %v356 = vpop.f32.mrb[0].mxu0
    %v357 = vadd.f32 %v78, %v356
    %v358 = vpop.f32.mrb[0].mxu0
    %359 = vmatprep.mubr.bf16.mxu0 0
    %360 = vmatmul.mubr.bf16.gmra.mrb[0].mxu0 %v156
    %v361 = vpop.f32.mrb[0].mxu0
    %v362 = vadd.f32 %v78, %v361
    %v363 = vpop.f32.mrb[0].mxu0
    %v364 = vpop.f32.mrb[0].mxu0
    %v365 = vadd.f32 %v78, %v364
    %v366 = vpop.f32.mrb[0].mxu0
    %367 = vmatprep.mubr.bf16.mxu0 0
    %368 = vmatmul.mubr.bf16.gmra.mrb[0].mxu0 %v159
    %v369 = vpop.f32.mrb[0].mxu0
    %v370 = vadd.f32 %v78, %v369
    %v371 = vpop.f32.mrb[0].mxu0
    %v372 = vpop.f32.mrb[0].mxu0
    %v373 = vadd.f32 %v78, %v372
    %v374 = vpop.f32.mrb[0].mxu0
    %375 = vmatprep.mubr.bf16.mxu0 0
    %376 = vmatmul.mubr.bf16.gmra.mrb[0].mxu0 %v162
    %v377 = vpop.f32.mrb[0].mxu0
    %v378 = vadd.f32 %v78, %v377
    %v379 = vpop.f32.mrb[0].mxu0
    %v380 = vpop.f32.mrb[0].mxu0
    %v381 = vadd.f32 %v78, %v380
    %v382 = vpop.f32.mrb[0].mxu0
    %383 = vdwg.mxu0
    %384 = vst [vmem:[#allocation3] sm:$0xff] %v209
    %385 = vst [vmem:[#allocation3 + $0x8] sm:$0xff] %v211
    %386 = vst [vmem:[#allocation3 + $0x10] sm:$0xff] %v322
    %387 = vst [vmem:[#allocation3 + $0x18] sm:$0xff] %v213
    %388 = vst [vmem:[#allocation3 + $0x20] sm:$0xff] %v215
    %389 = vst [vmem:[#allocation3 + $0x28] sm:$0xff] %v325
    %390 = vst [vmem:[#allocation3 + $0x30] sm:$0xff] %v219
    %391 = vst [vmem:[#allocation3 + $0x38] sm:$0xff] %v221
    %392 = vst [vmem:[#allocation3 + $0x40] sm:$0xff] %v330
    %393 = vst [vmem:[#allocation3 + $0x48] sm:$0xff] %v223
    %394 = vst [vmem:[#allocation3 + $0x50] sm:$0xff] %v225
    %395 = vst [vmem:[#allocation3 + $0x58] sm:$0xff] %v333
    %396 = vst [vmem:[#allocation3 + $0x60] sm:$0xff] %v229
    %397 = vst [vmem:[#allocation3 + $0x68] sm:$0xff] %v231
    %398 = vst [vmem:[#allocation3 + $0x70] sm:$0xff] %v338
    %399 = vst [vmem:[#allocation3 + $0x78] sm:$0xff] %v233
    %400 = vst [vmem:[#allocation3 + $0x80] sm:$0xff] %v235
    %401 = vst [vmem:[#allocation3 + $0x88] sm:$0xff] %v341
    %402 = vst [vmem:[#allocation3 + $0x90] sm:$0xff] %v239
    %403 = vst [vmem:[#allocation3 + $0x98] sm:$0xff] %v241
    %404 = vst [vmem:[#allocation3 + $0xa0] sm:$0xff] %v346
    %405 = vst [vmem:[#allocation3 + $0xa8] sm:$0xff] %v243
    %406 = vst [vmem:[#allocation3 + $0xb0] sm:$0xff] %v245
    %407 = vst [vmem:[#allocation3 + $0xb8] sm:$0xff] %v349
    %408 = vst [vmem:[#allocation3 + $0xc0] sm:$0xff] %v249
    %409 = vst [vmem:[#allocation3 + $0xc8] sm:$0xff] %v251
    %410 = vst [vmem:[#allocation3 + $0xd0] sm:$0xff] %v354
    %411 = vst [vmem:[#allocation3 + $0xd8] sm:$0xff] %v253
    %412 = vst [vmem:[#allocation3 + $0xe0] sm:$0xff] %v255
    %413 = vst [vmem:[#allocation3 + $0xe8] sm:$0xff] %v357
    %414 = vst [vmem:[#allocation3 + $0xf0] sm:$0xff] %v259
    %415 = vst [vmem:[#allocation3 + $0xf8] sm:$0xff] %v261
    %416 = vst [vmem:[#allocation3 + $0x100] sm:$0xff] %v362
    %417 = vst [vmem:[#allocation3 + $0x108] sm:$0xff] %v263
    %418 = vst [vmem:[#allocation3 + $0x110] sm:$0xff] %v265
    %419 = vst [vmem:[#allocation3 + $0x118] sm:$0xff] %v365
    %420 = vst [vmem:[#allocation3 + $0x120] sm:$0xff] %v269
    %421 = vst [vmem:[#allocation3 + $0x128] sm:$0xff] %v271
    %422 = vst [vmem:[#allocation3 + $0x130] sm:$0xff] %v370
    %423 = vst [vmem:[#allocation3 + $0x138] sm:$0xff] %v273
    %424 = vst [vmem:[#allocation3 + $0x140] sm:$0xff] %v275
    %425 = vst [vmem:[#allocation3 + $0x148] sm:$0xff] %v373
    %426 = vst [vmem:[#allocation3 + $0x150] sm:$0xff] %v279
    %427 = vst [vmem:[#allocation3 + $0x158] sm:$0xff] %v281
    %428 = vst [vmem:[#allocation3 + $0x160] sm:$0xff] %v378
    %429 = vst [vmem:[#allocation3 + $0x168] sm:$0xff] %v283
    %430 = vst [vmem:[#allocation3 + $0x170] sm:$0xff] %v285
    %431 = vst [vmem:[#allocation3 + $0x178] sm:$0xff] %v381
    %v432 = vld [vmem:[#allocation4] sm:$0xff]
    %v433 = vld [vmem:[#allocation4 + $0x8] sm:$0xf]
    %v434 = vld [vmem:[#allocation4 + $0xc] sm:$0xff]
    %v435 = vld [vmem:[#allocation4 + $0x14] sm:$0xf]
    %v436 = vld [vmem:[#allocation4 + $0x18] sm:$0xff]
    %v437 = vld [vmem:[#allocation4 + $0x20] sm:$0xf]
    %v438 = vld [vmem:[#allocation4 + $0x24] sm:$0xff]
    %v439 = vld [vmem:[#allocation4 + $0x2c] sm:$0xf]
    %v440 = vld [vmem:[#allocation4 + $0x30] sm:$0xff]
    %v441 = vld [vmem:[#allocation4 + $0x38] sm:$0xf]
    %v442 = vld [vmem:[#allocation4 + $0x3c] sm:$0xff]
    %v443 = vld [vmem:[#allocation4 + $0x44] sm:$0xf]
    %v444 = vld [vmem:[#allocation4 + $0x48] sm:$0xff]
    %v445 = vld [vmem:[#allocation4 + $0x50] sm:$0xf]
    %v446 = vld [vmem:[#allocation4 + $0x54] sm:$0xff]
    %v447 = vld [vmem:[#allocation4 + $0x5c] sm:$0xf]
    %v448 = vld [vmem:[#allocation4 + $0x60] sm:$0xff]
    %v449 = vld [vmem:[#allocation4 + $0x68] sm:$0xf]
    %v450 = vld [vmem:[#allocation4 + $0x6c] sm:$0xff]
    %v451 = vld [vmem:[#allocation4 + $0x74] sm:$0xf]
    %v452 = vld [vmem:[#allocation4 + $0x78] sm:$0xff]
    %v453 = vld [vmem:[#allocation4 + $0x80] sm:$0xf]
    %v454 = vld [vmem:[#allocation4 + $0x84] sm:$0xff]
    %v455 = vld [vmem:[#allocation4 + $0x8c] sm:$0xf]
    %v456 = vld [vmem:[#allocation4 + $0x90] sm:$0xff]
    %v457 = vld [vmem:[#allocation4 + $0x98] sm:$0xf]
    %v458 = vld [vmem:[#allocation4 + $0x9c] sm:$0xff]
    %v459 = vld [vmem:[#allocation4 + $0xa4] sm:$0xf]
    %v460 = vld [vmem:[#allocation4 + $0xa8] sm:$0xff]
    %v461 = vld [vmem:[#allocation4 + $0xb0] sm:$0xf]
    %v462 = vld [vmem:[#allocation4 + $0xb4] sm:$0xff]
    %v463 = vld [vmem:[#allocation4 + $0xbc] sm:$0xf]
    %v464 = vld [vmem:[%s4] sm:$0x1]
    %v465 = vld [vmem:[#allocation2] sm:$0xff]
    %v466 = vld [vmem:[#allocation2 + $0x8] sm:$0xff]
    %v467 = vld [vmem:[#allocation3] sm:$0xff]
    %v468 = vld [vmem:[#allocation3 + $0x8] sm:$0xff]
    %v469 = vld [vmem:[#allocation3 + $0x10] sm:$0xff]
    %v470 = vld [vmem:[#allocation3 + $0x18] sm:$0xff]
    %v471 = vld [vmem:[#allocation3 + $0x20] sm:$0xff]
    %v472 = vld [vmem:[#allocation3 + $0x28] sm:$0xff]
    %v473 = vpack.c.bf16 %v466, %v465
    %v506 = vunpack.c.l.b16 %v432
    %v507 = vunpack.c.h.b16 %v432
    %v508 = vunpack.c.l.b16 %v433
    %v509 = vunpack.c.l.b16 %v434
    %v510 = vunpack.c.h.b16 %v434
    %v511 = vunpack.c.l.b16 %v435
    %v512 = vunpack.c.l.b16 %v436
    %v513 = vunpack.c.h.b16 %v436
    %v514 = vunpack.c.l.b16 %v437
    %v515 = vunpack.c.l.b16 %v438
    %v516 = vunpack.c.h.b16 %v438
    %v517 = vunpack.c.l.b16 %v439
    %v518 = vunpack.c.l.b16 %v440
    %v519 = vunpack.c.h.b16 %v440
    %v520 = vunpack.c.l.b16 %v441
    %v521 = vunpack.c.l.b16 %v442
    %v522 = vunpack.c.h.b16 %v442
    %v523 = vunpack.c.l.b16 %v443
    %v524 = vunpack.c.l.b16 %v444
    %v525 = vunpack.c.h.b16 %v444
    %v526 = vunpack.c.l.b16 %v445
    %v527 = vunpack.c.l.b16 %v446
    %v528 = vunpack.c.h.b16 %v446
    %v529 = vunpack.c.l.b16 %v447
    %v530 = vunpack.c.l.b16 %v448
    %v531 = vunpack.c.h.b16 %v448
    %v532 = vunpack.c.l.b16 %v449
    %v533 = vunpack.c.l.b16 %v450
    %v534 = vunpack.c.h.b16 %v450
    %v535 = vunpack.c.l.b16 %v451
    %v536 = vunpack.c.l.b16 %v452
    %v537 = vunpack.c.h.b16 %v452
    %v538 = vunpack.c.l.b16 %v453
    %v539 = vunpack.c.l.b16 %v454
    %v540 = vunpack.c.h.b16 %v454
    %v541 = vunpack.c.l.b16 %v455
    %v542 = vunpack.c.l.b16 %v456
    %v543 = vunpack.c.h.b16 %v456
    %v544 = vunpack.c.l.b16 %v457
    %v545 = vunpack.c.l.b16 %v458
    %v546 = vunpack.c.h.b16 %v458
    %v547 = vunpack.c.l.b16 %v459
    %v548 = vunpack.c.l.b16 %v460
    %v549 = vunpack.c.h.b16 %v460
    %v550 = vunpack.c.l.b16 %v461
    %v551 = vunpack.c.l.b16 %v462
    %v552 = vunpack.c.h.b16 %v462
    %v553 = vunpack.c.l.b16 %v463
    %v554 = vpack.c.b16 %v509, %v506
    %v555 = vpack.c.b16 %v510, %v507
    %v556 = vpack.c.b16 %v511, %v508
    %v557 = vpack.c.b16 %v515, %v512
    %v558 = vpack.c.b16 %v516, %v513
    %v559 = vpack.c.b16 %v517, %v514
    %v560 = vpack.c.b16 %v521, %v518
    %v561 = vpack.c.b16 %v522, %v519
    %v562 = vpack.c.b16 %v523, %v520
    %v563 = vpack.c.b16 %v527, %v524
    %v564 = vpack.c.b16 %v528, %v525
    %v565 = vpack.c.b16 %v529, %v526
    %v566 = vpack.c.b16 %v533, %v530
    %v567 = vpack.c.b16 %v534, %v531
    %v568 = vpack.c.b16 %v535, %v532
    %v569 = vpack.c.b16 %v539, %v536
    %v570 = vpack.c.b16 %v540, %v537
    %v571 = vpack.c.b16 %v541, %v538
    %v572 = vpack.c.b16 %v545, %v542
    %v573 = vpack.c.b16 %v546, %v543
    %v574 = vpack.c.b16 %v547, %v544
    %v575 = vpack.c.b16 %v551, %v548
    %v576 = vpack.c.b16 %v552, %v549
    %v577 = vpack.c.b16 %v553, %v550
    %602 = vmatprep.subr.bf16.mxu0 %v555
    %603 = vmatpush1.bf16.msra.mxu0 %v554
    %604 = vmatprep.subr.bf16.mxu0 %v558
    %605 = vmatpush1.bf16.msra.mxu0 %v557
    %606 = vmatprep.subr.bf16.mxu0 %v561
    %607 = vmatpush1.bf16.msra.mxu0 %v560
    %608 = vmatprep.subr.bf16.mxu0 %v564
    %609 = vmatpush1.bf16.msra.mxu0 %v563
    %610 = vmatprep.subr.bf16.mxu0 %v567
    %611 = vmatpush1.bf16.msra.mxu0 %v566
    %612 = vmatprep.subr.bf16.mxu0 %v570
    %613 = vmatpush1.bf16.msra.mxu0 %v569
    %614 = vmatprep.subr.bf16.mxu0 %v573
    %615 = vmatpush1.bf16.msra.mxu0 %v572
    %616 = vmatprep.subr.bf16.mxu0 %v576
    %617 = vmatpush1.bf16.msra.mxu0 %v575
    %618 = vmatprep.subr.bf16.mxu0 0
    %619 = vmatpush1.bf16.msra.mxu0 0
    %620 = vmatprep.subr.bf16.mxu0 0
    %621 = vmatpush1.bf16.msra.mxu0 0
    %622 = vmatprep.subr.bf16.mxu0 0
    %623 = vmatpush1.bf16.msra.mxu0 0
    %624 = vmatprep.subr.bf16.mxu0 0
    %625 = vmatpush1.bf16.msra.mxu0 0
    %626 = vmatprep.subr.bf16.mxu0 0
    %627 = vmatpush1.bf16.msra.mxu0 0
    %628 = vmatprep.subr.bf16.mxu0 0
    %629 = vmatpush1.bf16.msra.mxu0 0
    %630 = vmatprep.subr.bf16.mxu0 0
    %631 = vmatpush1.bf16.msra.mxu0 0
    %632 = vmatprep.subr.bf16.mxu0 0
    %633 = vmatpush1.bf16.msra.mxu0 0
    %634 = vmatprep.mubr.bf16.mxu0 0
    %635 = vmatmul.mubr.bf16.gmra.mrb[0].mxu0 %v473
    %v636 = vpop.f32.mrb[0].mxu0
    %v637 = vadd.f32 0.0, %v636
    %v638 = vpop.f32.mrb[0].mxu0
    %v639 = vadd.f32 0.0, %v638
    %v640 = vpop.f32.mrb[0].mxu0
    %v641 = vadd.f32 0.0, %v640
    %v642 = vpop.f32.mrb[0].mxu0
    %v643 = vadd.f32 0.0, %v642
    %644 = vdwg.mxu0
    %645 = vmatprep.subr.bf16.mxu0 0
    %646 = vmatpush1.bf16.msra.mxu0 %v556
    %647 = vmatprep.subr.bf16.mxu0 0
    %648 = vmatpush1.bf16.msra.mxu0 %v559
    %649 = vmatprep.subr.bf16.mxu0 0
    %650 = vmatpush1.bf16.msra.mxu0 %v562
    %651 = vmatprep.subr.bf16.mxu0 0
    %652 = vmatpush1.bf16.msra.mxu0 %v565
    %653 = vmatprep.subr.bf16.mxu0 0
    %654 = vmatpush1.bf16.msra.mxu0 %v568
    %655 = vmatprep.subr.bf16.mxu0 0
    %656 = vmatpush1.bf16.msra.mxu0 %v571
    %657 = vmatprep.subr.bf16.mxu0 0
    %658 = vmatpush1.bf16.msra.mxu0 %v574
    %659 = vmatprep.subr.bf16.mxu0 0
    %660 = vmatpush1.bf16.msra.mxu0 %v577
    %661 = vmatprep.subr.bf16.mxu0 0
    %662 = vmatpush1.bf16.msra.mxu0 0
    %663 = vmatprep.subr.bf16.mxu0 0
    %664 = vmatpush1.bf16.msra.mxu0 0
    %665 = vmatprep.subr.bf16.mxu0 0
    %666 = vmatpush1.bf16.msra.mxu0 0
    %667 = vmatprep.subr.bf16.mxu0 0
    %668 = vmatpush1.bf16.msra.mxu0 0
    %669 = vmatprep.subr.bf16.mxu0 0
    %670 = vmatpush1.bf16.msra.mxu0 0
    %671 = vmatprep.subr.bf16.mxu0 0
    %672 = vmatpush1.bf16.msra.mxu0 0
    %673 = vmatprep.subr.bf16.mxu0 0
    %674 = vmatpush1.bf16.msra.mxu0 0
    %675 = vmatprep.subr.bf16.mxu0 0
    %676 = vmatpush1.bf16.msra.mxu0 0
    %677 = vmatprep.mubr.bf16.mxu0 0
    %678 = vmatmul.mubr.bf16.gmra.mrb[0].mxu0 %v473
    %v679 = vpop.f32.mrb[0].mxu0
    %v680 = vadd.f32 0.0, %v679
    %v681 = vpop.f32.mrb[0].mxu0
    %v682 = vpop.f32.mrb[0].mxu0
    %v683 = vadd.f32 0.0, %v682
    %v684 = vpop.f32.mrb[0].mxu0
    %685 = vdwg.mxu0
    %v686 = vadd.f32 %v467, %v637
    %v687 = vadd.f32 %v468, %v639
    %v688 = vadd.f32 %v470, %v641
    %v689 = vadd.f32 %v471, %v643
    %v690 = vxor.u32 %v686, 2147483648
    %v691 = vxor.u32 %v687, 2147483648
    %v692 = vxor.u32 %v688, 2147483648
    %v693 = vxor.u32 %v689, 2147483648
    %v694 = vmul.f32 %v690, 1.442695
    %v695 = vpow.pop %v694
    %v696 = vmul.f32 %v691, 1.442695
    %v697 = vpow.pop %v696
    %v698 = vmul.f32 %v692, 1.442695
    %v699 = vpow.pop %v698
    %v700 = vmul.f32 %v693, 1.442695
    %v701 = vpow.pop %v700
    %v702 = vadd.f32 %v695, 1.0
    %v703 = vadd.f32 %v697, 1.0
    %v704 = vadd.f32 %v699, 1.0
    %v705 = vadd.f32 %v701, 1.0
    %v706 = vrcp.pop %v702
    %v707 = vmul.f32 1.0, %v706
    %v708 = vrcp.pop %v703
    %v709 = vmul.f32 1.0, %v708
    %v710 = vrcp.pop %v704
    %v711 = vmul.f32 1.0, %v710
    %v712 = vrcp.pop %v705
    %v713 = vmul.f32 1.0, %v712
    %v715 = vlaneseq
    %v716 = vshrl.u32 %v715, 7
    %v717 = vsub.s32 0, %v716
    %v718 = vrot.slane %v464, %v717
    %v720 = vadd.f32 %v680, %v718
    %v721 = vadd.f32 %v683, %v718
    %v722 = vmul.f32 %v707, %v720
    %v723 = vmul.f32 %v711, %v721
    %v724 = vadd.f32 %v469, %v722
    %v725 = vadd.f32 %v472, %v723
    %v726 = vtanh.pop %v724
    %v727 = vtanh.pop %v725
    %v728 = vsub.f32 %v465, %v726
    %v729 = vsub.f32 %v466, %v727
    %v730 = vmul.f32 %v709, %v728
    %v731 = vmul.f32 %v713, %v729
    %v732 = vadd.f32 %v726, %v730
    %v733 = vadd.f32 %v727, %v731
    %s734 = scalar_lea.vmem [#allocation3], 48
    %v735 = vld [vmem:[%s734] sm:$0xff]
    %v736 = vld [vmem:[%s734 + $0x8] sm:$0xff]
    %v737 = vld [vmem:[%s734 + $0x10] sm:$0xff]
    %v738 = vld [vmem:[%s734 + $0x18] sm:$0xff]
    %v739 = vld [vmem:[%s734 + $0x20] sm:$0xff]
    %v740 = vld [vmem:[%s734 + $0x28] sm:$0xff]
    %v741 = vpack.c.bf16 %v733, %v732
    %742 = vmatprep.subr.bf16.mxu0 %v555
    %743 = vmatpush1.bf16.msra.mxu0 %v554
    %744 = vmatprep.subr.bf16.mxu0 %v558
    %745 = vmatpush1.bf16.msra.mxu0 %v557
    %746 = vmatprep.subr.bf16.mxu0 %v561
    %747 = vmatpush1.bf16.msra.mxu0 %v560
    %748 = vmatprep.subr.bf16.mxu0 %v564
    %749 = vmatpush1.bf16.msra.mxu0 %v563
    %750 = vmatprep.subr.bf16.mxu0 %v567
    %751 = vmatpush1.bf16.msra.mxu0 %v566
    %752 = vmatprep.subr.bf16.mxu0 %v570
    %753 = vmatpush1.bf16.msra.mxu0 %v569
    %754 = vmatprep.subr.bf16.mxu0 %v573
    %755 = vmatpush1.bf16.msra.mxu0 %v572
    %756 = vmatprep.subr.bf16.mxu0 %v576
    %757 = vmatpush1.bf16.msra.mxu0 %v575
    %758 = vmatprep.subr.bf16.mxu0 0
    %759 = vmatpush1.bf16.msra.mxu0 0
    %760 = vmatprep.subr.bf16.mxu0 0
    %761 = vmatpush1.bf16.msra.mxu0 0
    %762 = vmatprep.subr.bf16.mxu0 0
    %763 = vmatpush1.bf16.msra.mxu0 0
    %764 = vmatprep.subr.bf16.mxu0 0
    %765 = vmatpush1.bf16.msra.mxu0 0
    %766 = vmatprep.subr.bf16.mxu0 0
    %767 = vmatpush1.bf16.msra.mxu0 0
    %768 = vmatprep.subr.bf16.mxu0 0
    %769 = vmatpush1.bf16.msra.mxu0 0
    %770 = vmatprep.subr.bf16.mxu0 0
    %771 = vmatpush1.bf16.msra.mxu0 0
    %772 = vmatprep.subr.bf16.mxu0 0
    %773 = vmatpush1.bf16.msra.mxu0 0
    %774 = vmatprep.mubr.bf16.mxu0 0
    %775 = vmatmul.mubr.bf16.gmra.mrb[0].mxu0 %v741
    %v776 = vpop.f32.mrb[0].mxu0
    %v777 = vadd.f32 0.0, %v776
    %v778 = vpop.f32.mrb[0].mxu0
    %v779 = vadd.f32 0.0, %v778
    %v780 = vpop.f32.mrb[0].mxu0
    %v781 = vadd.f32 0.0, %v780
    %v782 = vpop.f32.mrb[0].mxu0
    %v783 = vadd.f32 0.0, %v782
    %784 = vdwg.mxu0
    %785 = vmatprep.subr.bf16.mxu0 0
    %786 = vmatpush1.bf16.msra.mxu0 %v556
    %787 = vmatprep.subr.bf16.mxu0 0
    %788 = vmatpush1.bf16.msra.mxu0 %v559
    %789 = vmatprep.subr.bf16.mxu0 0
    %790 = vmatpush1.bf16.msra.mxu0 %v562
    %791 = vmatprep.subr.bf16.mxu0 0
    %792 = vmatpush1.bf16.msra.mxu0 %v565
    %793 = vmatprep.subr.bf16.mxu0 0
    %794 = vmatpush1.bf16.msra.mxu0 %v568
    %795 = vmatprep.subr.bf16.mxu0 0
    %796 = vmatpush1.bf16.msra.mxu0 %v571
    %797 = vmatprep.subr.bf16.mxu0 0
    %798 = vmatpush1.bf16.msra.mxu0 %v574
    %799 = vmatprep.subr.bf16.mxu0 0
    %800 = vmatpush1.bf16.msra.mxu0 %v577
    %801 = vmatprep.subr.bf16.mxu0 0
    %802 = vmatpush1.bf16.msra.mxu0 0
    %803 = vmatprep.subr.bf16.mxu0 0
    %804 = vmatpush1.bf16.msra.mxu0 0
    %805 = vmatprep.subr.bf16.mxu0 0
    %806 = vmatpush1.bf16.msra.mxu0 0
    %807 = vmatprep.subr.bf16.mxu0 0
    %808 = vmatpush1.bf16.msra.mxu0 0
    %809 = vmatprep.subr.bf16.mxu0 0
    %810 = vmatpush1.bf16.msra.mxu0 0
    %811 = vmatprep.subr.bf16.mxu0 0
    %812 = vmatpush1.bf16.msra.mxu0 0
    %813 = vmatprep.subr.bf16.mxu0 0
    %814 = vmatpush1.bf16.msra.mxu0 0
    %815 = vmatprep.subr.bf16.mxu0 0
    %816 = vmatpush1.bf16.msra.mxu0 0
    %817 = vmatprep.mubr.bf16.mxu0 0
    %818 = vmatmul.mubr.bf16.gmra.mrb[0].mxu0 %v741
    %v819 = vpop.f32.mrb[0].mxu0
    %v820 = vadd.f32 0.0, %v819
    %v821 = vpop.f32.mrb[0].mxu0
    %v822 = vpop.f32.mrb[0].mxu0
    %v823 = vadd.f32 0.0, %v822
    %v824 = vpop.f32.mrb[0].mxu0
    %825 = vdwg.mxu0
    %v826 = vadd.f32 %v735, %v777
    %v827 = vadd.f32 %v736, %v779
    %v828 = vadd.f32 %v738, %v781
    %v829 = vadd.f32 %v739, %v783
    %v830 = vxor.u32 %v826, 2147483648
    %v831 = vxor.u32 %v827, 2147483648
    %v832 = vxor.u32 %v828, 2147483648
    %v833 = vxor.u32 %v829, 2147483648
    %v834 = vmul.f32 %v830, 1.442695
    %v835 = vpow.pop %v834
    %v836 = vmul.f32 %v831, 1.442695
    %v837 = vpow.pop %v836
    %v838 = vmul.f32 %v832, 1.442695
    %v839 = vpow.pop %v838
    %v840 = vmul.f32 %v833, 1.442695
    %v841 = vpow.pop %v840
    %v842 = vadd.f32 %v835, 1.0
    %v843 = vadd.f32 %v837, 1.0
    %v844 = vadd.f32 %v839, 1.0
    %v845 = vadd.f32 %v841, 1.0
    %v846 = vrcp.pop %v842
    %v847 = vmul.f32 1.0, %v846
    %v848 = vrcp.pop %v843
    %v849 = vmul.f32 1.0, %v848
    %v850 = vrcp.pop %v844
    %v851 = vmul.f32 1.0, %v850
    %v852 = vrcp.pop %v845
    %v853 = vmul.f32 1.0, %v852
    %v854 = vadd.f32 %v820, %v718
    %v855 = vadd.f32 %v823, %v718
    %v856 = vmul.f32 %v847, %v854
    %v857 = vmul.f32 %v851, %v855
    %v858 = vadd.f32 %v737, %v856
    %v859 = vadd.f32 %v740, %v857
    %v860 = vtanh.pop %v858
    %v861 = vtanh.pop %v859
    %v862 = vsub.f32 %v732, %v860
    %v863 = vsub.f32 %v733, %v861
    %v864 = vmul.f32 %v849, %v862
    %v865 = vmul.f32 %v853, %v863
    %v866 = vadd.f32 %v860, %v864
    %v867 = vadd.f32 %v861, %v865
    %s868 = scalar_lea.vmem [#allocation3], 96
    %v869 = vld [vmem:[%s868] sm:$0xff]
    %v870 = vld [vmem:[%s868 + $0x8] sm:$0xff]
    %v871 = vld [vmem:[%s868 + $0x10] sm:$0xff]
    %v872 = vld [vmem:[%s868 + $0x18] sm:$0xff]
    %v873 = vld [vmem:[%s868 + $0x20] sm:$0xff]
    %v874 = vld [vmem:[%s868 + $0x28] sm:$0xff]
    %v875 = vpack.c.bf16 %v867, %v866
    %876 = vmatprep.subr.bf16.mxu0 %v555
    %877 = vmatpush1.bf16.msra.mxu0 %v554
    %878 = vmatprep.subr.bf16.mxu0 %v558
    %879 = vmatpush1.bf16.msra.mxu0 %v557
    %880 = vmatprep.subr.bf16.mxu0 %v561
    %881 = vmatpush1.bf16.msra.mxu0 %v560
    %882 = vmatprep.subr.bf16.mxu0 %v564
    %883 = vmatpush1.bf16.msra.mxu0 %v563
    %884 = vmatprep.subr.bf16.mxu0 %v567
    %885 = vmatpush1.bf16.msra.mxu0 %v566
    %886 = vmatprep.subr.bf16.mxu0 %v570
    %887 = vmatpush1.bf16.msra.mxu0 %v569
    %888 = vmatprep.subr.bf16.mxu0 %v573
    %889 = vmatpush1.bf16.msra.mxu0 %v572
    %890 = vmatprep.subr.bf16.mxu0 %v576
    %891 = vmatpush1.bf16.msra.mxu0 %v575
    %892 = vmatprep.subr.bf16.mxu0 0
    %893 = vmatpush1.bf16.msra.mxu0 0
    %894 = vmatprep.subr.bf16.mxu0 0
    %895 = vmatpush1.bf16.msra.mxu0 0
    %896 = vmatprep.subr.bf16.mxu0 0
    %897 = vmatpush1.bf16.msra.mxu0 0
    %898 = vmatprep.subr.bf16.mxu0 0
    %899 = vmatpush1.bf16.msra.mxu0 0
    %900 = vmatprep.subr.bf16.mxu0 0
    %901 = vmatpush1.bf16.msra.mxu0 0
    %902 = vmatprep.subr.bf16.mxu0 0
    %903 = vmatpush1.bf16.msra.mxu0 0
    %904 = vmatprep.subr.bf16.mxu0 0
    %905 = vmatpush1.bf16.msra.mxu0 0
    %906 = vmatprep.subr.bf16.mxu0 0
    %907 = vmatpush1.bf16.msra.mxu0 0
    %908 = vmatprep.mubr.bf16.mxu0 0
    %909 = vmatmul.mubr.bf16.gmra.mrb[0].mxu0 %v875
    %v910 = vpop.f32.mrb[0].mxu0
    %v911 = vadd.f32 0.0, %v910
    %v912 = vpop.f32.mrb[0].mxu0
    %v913 = vadd.f32 0.0, %v912
    %v914 = vpop.f32.mrb[0].mxu0
    %v915 = vadd.f32 0.0, %v914
    %v916 = vpop.f32.mrb[0].mxu0
    %v917 = vadd.f32 0.0, %v916
    %918 = vdwg.mxu0
    %919 = vmatprep.subr.bf16.mxu0 0
    %920 = vmatpush1.bf16.msra.mxu0 %v556
    %921 = vmatprep.subr.bf16.mxu0 0
    %922 = vmatpush1.bf16.msra.mxu0 %v559
    %923 = vmatprep.subr.bf16.mxu0 0
    %924 = vmatpush1.bf16.msra.mxu0 %v562
    %925 = vmatprep.subr.bf16.mxu0 0
    %926 = vmatpush1.bf16.msra.mxu0 %v565
    %927 = vmatprep.subr.bf16.mxu0 0
    %928 = vmatpush1.bf16.msra.mxu0 %v568
    %929 = vmatprep.subr.bf16.mxu0 0
    %930 = vmatpush1.bf16.msra.mxu0 %v571
    %931 = vmatprep.subr.bf16.mxu0 0
    %932 = vmatpush1.bf16.msra.mxu0 %v574
    %933 = vmatprep.subr.bf16.mxu0 0
    %934 = vmatpush1.bf16.msra.mxu0 %v577
    %935 = vmatprep.subr.bf16.mxu0 0
    %936 = vmatpush1.bf16.msra.mxu0 0
    %937 = vmatprep.subr.bf16.mxu0 0
    %938 = vmatpush1.bf16.msra.mxu0 0
    %939 = vmatprep.subr.bf16.mxu0 0
    %940 = vmatpush1.bf16.msra.mxu0 0
    %941 = vmatprep.subr.bf16.mxu0 0
    %942 = vmatpush1.bf16.msra.mxu0 0
    %943 = vmatprep.subr.bf16.mxu0 0
    %944 = vmatpush1.bf16.msra.mxu0 0
    %945 = vmatprep.subr.bf16.mxu0 0
    %946 = vmatpush1.bf16.msra.mxu0 0
    %947 = vmatprep.subr.bf16.mxu0 0
    %948 = vmatpush1.bf16.msra.mxu0 0
    %949 = vmatprep.subr.bf16.mxu0 0
    %950 = vmatpush1.bf16.msra.mxu0 0
    %951 = vmatprep.mubr.bf16.mxu0 0
    %952 = vmatmul.mubr.bf16.gmra.mrb[0].mxu0 %v875
    %v953 = vpop.f32.mrb[0].mxu0
    %v954 = vadd.f32 0.0, %v953
    %v955 = vpop.f32.mrb[0].mxu0
    %v956 = vpop.f32.mrb[0].mxu0
    %v957 = vadd.f32 0.0, %v956
    %v958 = vpop.f32.mrb[0].mxu0
    %959 = vdwg.mxu0
    %v960 = vadd.f32 %v869, %v911
    %v961 = vadd.f32 %v870, %v913
    %v962 = vadd.f32 %v872, %v915
    %v963 = vadd.f32 %v873, %v917
    %v964 = vxor.u32 %v960, 2147483648
    %v965 = vxor.u32 %v961, 2147483648
    %v966 = vxor.u32 %v962, 2147483648
    %v967 = vxor.u32 %v963, 2147483648
    %v968 = vmul.f32 %v964, 1.442695
    %v969 = vpow.pop %v968
    %v970 = vmul.f32 %v965, 1.442695
    %v971 = vpow.pop %v970
    %v972 = vmul.f32 %v966, 1.442695
    %v973 = vpow.pop %v972
    %v974 = vmul.f32 %v967, 1.442695
    %v975 = vpow.pop %v974
    %v976 = vadd.f32 %v969, 1.0
    %v977 = vadd.f32 %v971, 1.0
    %v978 = vadd.f32 %v973, 1.0
    %v979 = vadd.f32 %v975, 1.0
    %v980 = vrcp.pop %v976
    %v981 = vmul.f32 1.0, %v980
    %v982 = vrcp.pop %v977
    %v983 = vmul.f32 1.0, %v982
    %v984 = vrcp.pop %v978
    %v985 = vmul.f32 1.0, %v984
    %v986 = vrcp.pop %v979
    %v987 = vmul.f32 1.0, %v986
    %v988 = vadd.f32 %v954, %v718
    %v989 = vadd.f32 %v957, %v718
    %v990 = vmul.f32 %v981, %v988
    %v991 = vmul.f32 %v985, %v989
    %v992 = vadd.f32 %v871, %v990
    %v993 = vadd.f32 %v874, %v991
    %v994 = vtanh.pop %v992
    %v995 = vtanh.pop %v993
    %v996 = vsub.f32 %v866, %v994
    %v997 = vsub.f32 %v867, %v995
    %v998 = vmul.f32 %v983, %v996
    %v999 = vmul.f32 %v987, %v997
    %v1000 = vadd.f32 %v994, %v998
    %v1001 = vadd.f32 %v995, %v999
    %s1002 = scalar_lea.vmem [#allocation3], 144
    %v1003 = vld [vmem:[%s1002] sm:$0xff]
    %v1004 = vld [vmem:[%s1002 + $0x8] sm:$0xff]
    %v1005 = vld [vmem:[%s1002 + $0x10] sm:$0xff]
    %v1006 = vld [vmem:[%s1002 + $0x18] sm:$0xff]
    %v1007 = vld [vmem:[%s1002 + $0x20] sm:$0xff]
    %v1008 = vld [vmem:[%s1002 + $0x28] sm:$0xff]
    %v1009 = vpack.c.bf16 %v1001, %v1000
    %1010 = vmatprep.subr.bf16.mxu0 %v555
    %1011 = vmatpush1.bf16.msra.mxu0 %v554
    %1012 = vmatprep.subr.bf16.mxu0 %v558
    %1013 = vmatpush1.bf16.msra.mxu0 %v557
    %1014 = vmatprep.subr.bf16.mxu0 %v561
    %1015 = vmatpush1.bf16.msra.mxu0 %v560
    %1016 = vmatprep.subr.bf16.mxu0 %v564
    %1017 = vmatpush1.bf16.msra.mxu0 %v563
    %1018 = vmatprep.subr.bf16.mxu0 %v567
    %1019 = vmatpush1.bf16.msra.mxu0 %v566
    %1020 = vmatprep.subr.bf16.mxu0 %v570
    %1021 = vmatpush1.bf16.msra.mxu0 %v569
    %1022 = vmatprep.subr.bf16.mxu0 %v573
    %1023 = vmatpush1.bf16.msra.mxu0 %v572
    %1024 = vmatprep.subr.bf16.mxu0 %v576
    %1025 = vmatpush1.bf16.msra.mxu0 %v575
    %1026 = vmatprep.subr.bf16.mxu0 0
    %1027 = vmatpush1.bf16.msra.mxu0 0
    %1028 = vmatprep.subr.bf16.mxu0 0
    %1029 = vmatpush1.bf16.msra.mxu0 0
    %1030 = vmatprep.subr.bf16.mxu0 0
    %1031 = vmatpush1.bf16.msra.mxu0 0
    %1032 = vmatprep.subr.bf16.mxu0 0
    %1033 = vmatpush1.bf16.msra.mxu0 0
    %1034 = vmatprep.subr.bf16.mxu0 0
    %1035 = vmatpush1.bf16.msra.mxu0 0
    %1036 = vmatprep.subr.bf16.mxu0 0
    %1037 = vmatpush1.bf16.msra.mxu0 0
    %1038 = vmatprep.subr.bf16.mxu0 0
    %1039 = vmatpush1.bf16.msra.mxu0 0
    %1040 = vmatprep.subr.bf16.mxu0 0
    %1041 = vmatpush1.bf16.msra.mxu0 0
    %1042 = vmatprep.mubr.bf16.mxu0 0
    %1043 = vmatmul.mubr.bf16.gmra.mrb[0].mxu0 %v1009
    %v1044 = vpop.f32.mrb[0].mxu0
    %v1045 = vadd.f32 0.0, %v1044
    %v1046 = vpop.f32.mrb[0].mxu0
    %v1047 = vadd.f32 0.0, %v1046
    %v1048 = vpop.f32.mrb[0].mxu0
    %v1049 = vadd.f32 0.0, %v1048
    %v1050 = vpop.f32.mrb[0].mxu0
    %v1051 = vadd.f32 0.0, %v1050
    %1052 = vdwg.mxu0
    %1053 = vmatprep.subr.bf16.mxu0 0
    %1054 = vmatpush1.bf16.msra.mxu0 %v556
    %1055 = vmatprep.subr.bf16.mxu0 0
    %1056 = vmatpush1.bf16.msra.mxu0 %v559
    %1057 = vmatprep.subr.bf16.mxu0 0
    %1058 = vmatpush1.bf16.msra.mxu0 %v562
    %1059 = vmatprep.subr.bf16.mxu0 0
    %1060 = vmatpush1.bf16.msra.mxu0 %v565
    %1061 = vmatprep.subr.bf16.mxu0 0
    %1062 = vmatpush1.bf16.msra.mxu0 %v568
    %1063 = vmatprep.subr.bf16.mxu0 0
    %1064 = vmatpush1.bf16.msra.mxu0 %v571
    %1065 = vmatprep.subr.bf16.mxu0 0
    %1066 = vmatpush1.bf16.msra.mxu0 %v574
    %1067 = vmatprep.subr.bf16.mxu0 0
    %1068 = vmatpush1.bf16.msra.mxu0 %v577
    %1069 = vmatprep.subr.bf16.mxu0 0
    %1070 = vmatpush1.bf16.msra.mxu0 0
    %1071 = vmatprep.subr.bf16.mxu0 0
    %1072 = vmatpush1.bf16.msra.mxu0 0
    %1073 = vmatprep.subr.bf16.mxu0 0
    %1074 = vmatpush1.bf16.msra.mxu0 0
    %1075 = vmatprep.subr.bf16.mxu0 0
    %1076 = vmatpush1.bf16.msra.mxu0 0
    %1077 = vmatprep.subr.bf16.mxu0 0
    %1078 = vmatpush1.bf16.msra.mxu0 0
    %1079 = vmatprep.subr.bf16.mxu0 0
    %1080 = vmatpush1.bf16.msra.mxu0 0
    %1081 = vmatprep.subr.bf16.mxu0 0
    %1082 = vmatpush1.bf16.msra.mxu0 0
    %1083 = vmatprep.subr.bf16.mxu0 0
    %1084 = vmatpush1.bf16.msra.mxu0 0
    %1085 = vmatprep.mubr.bf16.mxu0 0
    %1086 = vmatmul.mubr.bf16.gmra.mrb[0].mxu0 %v1009
    %v1087 = vpop.f32.mrb[0].mxu0
    %v1088 = vadd.f32 0.0, %v1087
    %v1089 = vpop.f32.mrb[0].mxu0
    %v1090 = vpop.f32.mrb[0].mxu0
    %v1091 = vadd.f32 0.0, %v1090
    %v1092 = vpop.f32.mrb[0].mxu0
    %1093 = vdwg.mxu0
    %v1094 = vadd.f32 %v1003, %v1045
    %v1095 = vadd.f32 %v1004, %v1047
    %v1096 = vadd.f32 %v1006, %v1049
    %v1097 = vadd.f32 %v1007, %v1051
    %v1098 = vxor.u32 %v1094, 2147483648
    %v1099 = vxor.u32 %v1095, 2147483648
    %v1100 = vxor.u32 %v1096, 2147483648
    %v1101 = vxor.u32 %v1097, 2147483648
    %v1102 = vmul.f32 %v1098, 1.442695
    %v1103 = vpow.pop %v1102
    %v1104 = vmul.f32 %v1099, 1.442695
    %v1105 = vpow.pop %v1104
    %v1106 = vmul.f32 %v1100, 1.442695
    %v1107 = vpow.pop %v1106
    %v1108 = vmul.f32 %v1101, 1.442695
    %v1109 = vpow.pop %v1108
    %v1110 = vadd.f32 %v1103, 1.0
    %v1111 = vadd.f32 %v1105, 1.0
    %v1112 = vadd.f32 %v1107, 1.0
    %v1113 = vadd.f32 %v1109, 1.0
    %v1114 = vrcp.pop %v1110
    %v1115 = vmul.f32 1.0, %v1114
    %v1116 = vrcp.pop %v1111
    %v1117 = vmul.f32 1.0, %v1116
    %v1118 = vrcp.pop %v1112
    %v1119 = vmul.f32 1.0, %v1118
    %v1120 = vrcp.pop %v1113
    %v1121 = vmul.f32 1.0, %v1120
    %v1122 = vadd.f32 %v1088, %v718
    %v1123 = vadd.f32 %v1091, %v718
    %v1124 = vmul.f32 %v1115, %v1122
    %v1125 = vmul.f32 %v1119, %v1123
    %v1126 = vadd.f32 %v1005, %v1124
    %v1127 = vadd.f32 %v1008, %v1125
    %v1128 = vtanh.pop %v1126
    %v1129 = vtanh.pop %v1127
    %v1130 = vsub.f32 %v1000, %v1128
    %v1131 = vsub.f32 %v1001, %v1129
    %v1132 = vmul.f32 %v1117, %v1130
    %v1133 = vmul.f32 %v1121, %v1131
    %v1134 = vadd.f32 %v1128, %v1132
    %v1135 = vadd.f32 %v1129, %v1133
    %s1136 = scalar_lea.vmem [#allocation3], 192
    %v1137 = vld [vmem:[%s1136] sm:$0xff]
    %v1138 = vld [vmem:[%s1136 + $0x8] sm:$0xff]
    %v1139 = vld [vmem:[%s1136 + $0x10] sm:$0xff]
    %v1140 = vld [vmem:[%s1136 + $0x18] sm:$0xff]
    %v1141 = vld [vmem:[%s1136 + $0x20] sm:$0xff]
    %v1142 = vld [vmem:[%s1136 + $0x28] sm:$0xff]
    %v1143 = vpack.c.bf16 %v1135, %v1134
    %1144 = vmatprep.subr.bf16.mxu0 %v555
    %1145 = vmatpush1.bf16.msra.mxu0 %v554
    %1146 = vmatprep.subr.bf16.mxu0 %v558
    %1147 = vmatpush1.bf16.msra.mxu0 %v557
    %1148 = vmatprep.subr.bf16.mxu0 %v561
    %1149 = vmatpush1.bf16.msra.mxu0 %v560
    %1150 = vmatprep.subr.bf16.mxu0 %v564
    %1151 = vmatpush1.bf16.msra.mxu0 %v563
    %1152 = vmatprep.subr.bf16.mxu0 %v567
    %1153 = vmatpush1.bf16.msra.mxu0 %v566
    %1154 = vmatprep.subr.bf16.mxu0 %v570
    %1155 = vmatpush1.bf16.msra.mxu0 %v569
    %1156 = vmatprep.subr.bf16.mxu0 %v573
    %1157 = vmatpush1.bf16.msra.mxu0 %v572
    %1158 = vmatprep.subr.bf16.mxu0 %v576
    %1159 = vmatpush1.bf16.msra.mxu0 %v575
    %1160 = vmatprep.subr.bf16.mxu0 0
    %1161 = vmatpush1.bf16.msra.mxu0 0
    %1162 = vmatprep.subr.bf16.mxu0 0
    %1163 = vmatpush1.bf16.msra.mxu0 0
    %1164 = vmatprep.subr.bf16.mxu0 0
    %1165 = vmatpush1.bf16.msra.mxu0 0
    %1166 = vmatprep.subr.bf16.mxu0 0
    %1167 = vmatpush1.bf16.msra.mxu0 0
    %1168 = vmatprep.subr.bf16.mxu0 0
    %1169 = vmatpush1.bf16.msra.mxu0 0
    %1170 = vmatprep.subr.bf16.mxu0 0
    %1171 = vmatpush1.bf16.msra.mxu0 0
    %1172 = vmatprep.subr.bf16.mxu0 0
    %1173 = vmatpush1.bf16.msra.mxu0 0
    %1174 = vmatprep.subr.bf16.mxu0 0
    %1175 = vmatpush1.bf16.msra.mxu0 0
    %1176 = vmatprep.mubr.bf16.mxu0 0
    %1177 = vmatmul.mubr.bf16.gmra.mrb[0].mxu0 %v1143
    %v1178 = vpop.f32.mrb[0].mxu0
    %v1179 = vadd.f32 0.0, %v1178
    %v1180 = vpop.f32.mrb[0].mxu0
    %v1181 = vadd.f32 0.0, %v1180
    %v1182 = vpop.f32.mrb[0].mxu0
    %v1183 = vadd.f32 0.0, %v1182
    %v1184 = vpop.f32.mrb[0].mxu0
    %v1185 = vadd.f32 0.0, %v1184
    %1186 = vdwg.mxu0
    %1187 = vmatprep.subr.bf16.mxu0 0
    %1188 = vmatpush1.bf16.msra.mxu0 %v556
    %1189 = vmatprep.subr.bf16.mxu0 0
    %1190 = vmatpush1.bf16.msra.mxu0 %v559
    %1191 = vmatprep.subr.bf16.mxu0 0
    %1192 = vmatpush1.bf16.msra.mxu0 %v562
    %1193 = vmatprep.subr.bf16.mxu0 0
    %1194 = vmatpush1.bf16.msra.mxu0 %v565
    %1195 = vmatprep.subr.bf16.mxu0 0
    %1196 = vmatpush1.bf16.msra.mxu0 %v568
    %1197 = vmatprep.subr.bf16.mxu0 0
    %1198 = vmatpush1.bf16.msra.mxu0 %v571
    %1199 = vmatprep.subr.bf16.mxu0 0
    %1200 = vmatpush1.bf16.msra.mxu0 %v574
    %1201 = vmatprep.subr.bf16.mxu0 0
    %1202 = vmatpush1.bf16.msra.mxu0 %v577
    %1203 = vmatprep.subr.bf16.mxu0 0
    %1204 = vmatpush1.bf16.msra.mxu0 0
    %1205 = vmatprep.subr.bf16.mxu0 0
    %1206 = vmatpush1.bf16.msra.mxu0 0
    %1207 = vmatprep.subr.bf16.mxu0 0
    %1208 = vmatpush1.bf16.msra.mxu0 0
    %1209 = vmatprep.subr.bf16.mxu0 0
    %1210 = vmatpush1.bf16.msra.mxu0 0
    %1211 = vmatprep.subr.bf16.mxu0 0
    %1212 = vmatpush1.bf16.msra.mxu0 0
    %1213 = vmatprep.subr.bf16.mxu0 0
    %1214 = vmatpush1.bf16.msra.mxu0 0
    %1215 = vmatprep.subr.bf16.mxu0 0
    %1216 = vmatpush1.bf16.msra.mxu0 0
    %1217 = vmatprep.subr.bf16.mxu0 0
    %1218 = vmatpush1.bf16.msra.mxu0 0
    %1219 = vmatprep.mubr.bf16.mxu0 0
    %1220 = vmatmul.mubr.bf16.gmra.mrb[0].mxu0 %v1143
    %v1221 = vpop.f32.mrb[0].mxu0
    %v1222 = vadd.f32 0.0, %v1221
    %v1223 = vpop.f32.mrb[0].mxu0
    %v1224 = vpop.f32.mrb[0].mxu0
    %v1225 = vadd.f32 0.0, %v1224
    %v1226 = vpop.f32.mrb[0].mxu0
    %1227 = vdwg.mxu0
    %v1228 = vadd.f32 %v1137, %v1179
    %v1229 = vadd.f32 %v1138, %v1181
    %v1230 = vadd.f32 %v1140, %v1183
    %v1231 = vadd.f32 %v1141, %v1185
    %v1232 = vxor.u32 %v1228, 2147483648
    %v1233 = vxor.u32 %v1229, 2147483648
    %v1234 = vxor.u32 %v1230, 2147483648
    %v1235 = vxor.u32 %v1231, 2147483648
    %v1236 = vmul.f32 %v1232, 1.442695
    %v1237 = vpow.pop %v1236
    %v1238 = vmul.f32 %v1233, 1.442695
    %v1239 = vpow.pop %v1238
    %v1240 = vmul.f32 %v1234, 1.442695
    %v1241 = vpow.pop %v1240
    %v1242 = vmul.f32 %v1235, 1.442695
    %v1243 = vpow.pop %v1242
    %v1244 = vadd.f32 %v1237, 1.0
    %v1245 = vadd.f32 %v1239, 1.0
    %v1246 = vadd.f32 %v1241, 1.0
    %v1247 = vadd.f32 %v1243, 1.0
    %v1248 = vrcp.pop %v1244
    %v1249 = vmul.f32 1.0, %v1248
    %v1250 = vrcp.pop %v1245
    %v1251 = vmul.f32 1.0, %v1250
    %v1252 = vrcp.pop %v1246
    %v1253 = vmul.f32 1.0, %v1252
    %v1254 = vrcp.pop %v1247
    %v1255 = vmul.f32 1.0, %v1254
    %v1256 = vadd.f32 %v1222, %v718
    %v1257 = vadd.f32 %v1225, %v718
    %v1258 = vmul.f32 %v1249, %v1256
    %v1259 = vmul.f32 %v1253, %v1257
    %v1260 = vadd.f32 %v1139, %v1258
    %v1261 = vadd.f32 %v1142, %v1259
    %v1262 = vtanh.pop %v1260
    %v1263 = vtanh.pop %v1261
    %v1264 = vsub.f32 %v1134, %v1262
    %v1265 = vsub.f32 %v1135, %v1263
    %v1266 = vmul.f32 %v1251, %v1264
    %v1267 = vmul.f32 %v1255, %v1265
    %v1268 = vadd.f32 %v1262, %v1266
    %v1269 = vadd.f32 %v1263, %v1267
    %s1270 = scalar_lea.vmem [#allocation3], 240
    %v1271 = vld [vmem:[%s1270] sm:$0xff]
    %v1272 = vld [vmem:[%s1270 + $0x8] sm:$0xff]
    %v1273 = vld [vmem:[%s1270 + $0x10] sm:$0xff]
    %v1274 = vld [vmem:[%s1270 + $0x18] sm:$0xff]
    %v1275 = vld [vmem:[%s1270 + $0x20] sm:$0xff]
    %v1276 = vld [vmem:[%s1270 + $0x28] sm:$0xff]
    %v1277 = vpack.c.bf16 %v1269, %v1268
    %1278 = vmatprep.subr.bf16.mxu0 %v555
    %1279 = vmatpush1.bf16.msra.mxu0 %v554
    %1280 = vmatprep.subr.bf16.mxu0 %v558
    %1281 = vmatpush1.bf16.msra.mxu0 %v557
    %1282 = vmatprep.subr.bf16.mxu0 %v561
    %1283 = vmatpush1.bf16.msra.mxu0 %v560
    %1284 = vmatprep.subr.bf16.mxu0 %v564
    %1285 = vmatpush1.bf16.msra.mxu0 %v563
    %1286 = vmatprep.subr.bf16.mxu0 %v567
    %1287 = vmatpush1.bf16.msra.mxu0 %v566
    %1288 = vmatprep.subr.bf16.mxu0 %v570
    %1289 = vmatpush1.bf16.msra.mxu0 %v569
    %1290 = vmatprep.subr.bf16.mxu0 %v573
    %1291 = vmatpush1.bf16.msra.mxu0 %v572
    %1292 = vmatprep.subr.bf16.mxu0 %v576
    %1293 = vmatpush1.bf16.msra.mxu0 %v575
    %1294 = vmatprep.subr.bf16.mxu0 0
    %1295 = vmatpush1.bf16.msra.mxu0 0
    %1296 = vmatprep.subr.bf16.mxu0 0
    %1297 = vmatpush1.bf16.msra.mxu0 0
    %1298 = vmatprep.subr.bf16.mxu0 0
    %1299 = vmatpush1.bf16.msra.mxu0 0
    %1300 = vmatprep.subr.bf16.mxu0 0
    %1301 = vmatpush1.bf16.msra.mxu0 0
    %1302 = vmatprep.subr.bf16.mxu0 0
    %1303 = vmatpush1.bf16.msra.mxu0 0
    %1304 = vmatprep.subr.bf16.mxu0 0
    %1305 = vmatpush1.bf16.msra.mxu0 0
    %1306 = vmatprep.subr.bf16.mxu0 0
    %1307 = vmatpush1.bf16.msra.mxu0 0
    %1308 = vmatprep.subr.bf16.mxu0 0
    %1309 = vmatpush1.bf16.msra.mxu0 0
    %1310 = vmatprep.mubr.bf16.mxu0 0
    %1311 = vmatmul.mubr.bf16.gmra.mrb[0].mxu0 %v1277
    %v1312 = vpop.f32.mrb[0].mxu0
    %v1313 = vadd.f32 0.0, %v1312
    %v1314 = vpop.f32.mrb[0].mxu0
    %v1315 = vadd.f32 0.0, %v1314
    %v1316 = vpop.f32.mrb[0].mxu0
    %v1317 = vadd.f32 0.0, %v1316
    %v1318 = vpop.f32.mrb[0].mxu0
    %v1319 = vadd.f32 0.0, %v1318
    %1320 = vdwg.mxu0
    %1321 = vmatprep.subr.bf16.mxu0 0
    %1322 = vmatpush1.bf16.msra.mxu0 %v556
    %1323 = vmatprep.subr.bf16.mxu0 0
    %1324 = vmatpush1.bf16.msra.mxu0 %v559
    %1325 = vmatprep.subr.bf16.mxu0 0
    %1326 = vmatpush1.bf16.msra.mxu0 %v562
    %1327 = vmatprep.subr.bf16.mxu0 0
    %1328 = vmatpush1.bf16.msra.mxu0 %v565
    %1329 = vmatprep.subr.bf16.mxu0 0
    %1330 = vmatpush1.bf16.msra.mxu0 %v568
    %1331 = vmatprep.subr.bf16.mxu0 0
    %1332 = vmatpush1.bf16.msra.mxu0 %v571
    %1333 = vmatprep.subr.bf16.mxu0 0
    %1334 = vmatpush1.bf16.msra.mxu0 %v574
    %1335 = vmatprep.subr.bf16.mxu0 0
    %1336 = vmatpush1.bf16.msra.mxu0 %v577
    %1337 = vmatprep.subr.bf16.mxu0 0
    %1338 = vmatpush1.bf16.msra.mxu0 0
    %1339 = vmatprep.subr.bf16.mxu0 0
    %1340 = vmatpush1.bf16.msra.mxu0 0
    %1341 = vmatprep.subr.bf16.mxu0 0
    %1342 = vmatpush1.bf16.msra.mxu0 0
    %1343 = vmatprep.subr.bf16.mxu0 0
    %1344 = vmatpush1.bf16.msra.mxu0 0
    %1345 = vmatprep.subr.bf16.mxu0 0
    %1346 = vmatpush1.bf16.msra.mxu0 0
    %1347 = vmatprep.subr.bf16.mxu0 0
    %1348 = vmatpush1.bf16.msra.mxu0 0
    %1349 = vmatprep.subr.bf16.mxu0 0
    %1350 = vmatpush1.bf16.msra.mxu0 0
    %1351 = vmatprep.subr.bf16.mxu0 0
    %1352 = vmatpush1.bf16.msra.mxu0 0
    %1353 = vmatprep.mubr.bf16.mxu0 0
    %1354 = vmatmul.mubr.bf16.gmra.mrb[0].mxu0 %v1277
    %v1355 = vpop.f32.mrb[0].mxu0
    %v1356 = vadd.f32 0.0, %v1355
    %v1357 = vpop.f32.mrb[0].mxu0
    %v1358 = vpop.f32.mrb[0].mxu0
    %v1359 = vadd.f32 0.0, %v1358
    %v1360 = vpop.f32.mrb[0].mxu0
    %1361 = vdwg.mxu0
    %v1362 = vadd.f32 %v1271, %v1313
    %v1363 = vadd.f32 %v1272, %v1315
    %v1364 = vadd.f32 %v1274, %v1317
    %v1365 = vadd.f32 %v1275, %v1319
    %v1366 = vxor.u32 %v1362, 2147483648
    %v1367 = vxor.u32 %v1363, 2147483648
    %v1368 = vxor.u32 %v1364, 2147483648
    %v1369 = vxor.u32 %v1365, 2147483648
    %v1370 = vmul.f32 %v1366, 1.442695
    %v1371 = vpow.pop %v1370
    %v1372 = vmul.f32 %v1367, 1.442695
    %v1373 = vpow.pop %v1372
    %v1374 = vmul.f32 %v1368, 1.442695
    %v1375 = vpow.pop %v1374
    %v1376 = vmul.f32 %v1369, 1.442695
    %v1377 = vpow.pop %v1376
    %v1378 = vadd.f32 %v1371, 1.0
    %v1379 = vadd.f32 %v1373, 1.0
    %v1380 = vadd.f32 %v1375, 1.0
    %v1381 = vadd.f32 %v1377, 1.0
    %v1382 = vrcp.pop %v1378
    %v1383 = vmul.f32 1.0, %v1382
    %v1384 = vrcp.pop %v1379
    %v1385 = vmul.f32 1.0, %v1384
    %v1386 = vrcp.pop %v1380
    %v1387 = vmul.f32 1.0, %v1386
    %v1388 = vrcp.pop %v1381
    %v1389 = vmul.f32 1.0, %v1388
    %v1390 = vadd.f32 %v1356, %v718
    %v1391 = vadd.f32 %v1359, %v718
    %v1392 = vmul.f32 %v1383, %v1390
    %v1393 = vmul.f32 %v1387, %v1391
    %v1394 = vadd.f32 %v1273, %v1392
    %v1395 = vadd.f32 %v1276, %v1393
    %v1396 = vtanh.pop %v1394
    %v1397 = vtanh.pop %v1395
    %v1398 = vsub.f32 %v1268, %v1396
    %v1399 = vsub.f32 %v1269, %v1397
    %v1400 = vmul.f32 %v1385, %v1398
    %v1401 = vmul.f32 %v1389, %v1399
    %v1402 = vadd.f32 %v1396, %v1400
    %v1403 = vadd.f32 %v1397, %v1401
    %s1404 = scalar_lea.vmem [#allocation3], 288
    %v1405 = vld [vmem:[%s1404] sm:$0xff]
    %v1406 = vld [vmem:[%s1404 + $0x8] sm:$0xff]
    %v1407 = vld [vmem:[%s1404 + $0x10] sm:$0xff]
    %v1408 = vld [vmem:[%s1404 + $0x18] sm:$0xff]
    %v1409 = vld [vmem:[%s1404 + $0x20] sm:$0xff]
    %v1410 = vld [vmem:[%s1404 + $0x28] sm:$0xff]
    %v1411 = vpack.c.bf16 %v1403, %v1402
    %1412 = vmatprep.subr.bf16.mxu0 %v555
    %1413 = vmatpush1.bf16.msra.mxu0 %v554
    %1414 = vmatprep.subr.bf16.mxu0 %v558
    %1415 = vmatpush1.bf16.msra.mxu0 %v557
    %1416 = vmatprep.subr.bf16.mxu0 %v561
    %1417 = vmatpush1.bf16.msra.mxu0 %v560
    %1418 = vmatprep.subr.bf16.mxu0 %v564
    %1419 = vmatpush1.bf16.msra.mxu0 %v563
    %1420 = vmatprep.subr.bf16.mxu0 %v567
    %1421 = vmatpush1.bf16.msra.mxu0 %v566
    %1422 = vmatprep.subr.bf16.mxu0 %v570
    %1423 = vmatpush1.bf16.msra.mxu0 %v569
    %1424 = vmatprep.subr.bf16.mxu0 %v573
    %1425 = vmatpush1.bf16.msra.mxu0 %v572
    %1426 = vmatprep.subr.bf16.mxu0 %v576
    %1427 = vmatpush1.bf16.msra.mxu0 %v575
    %1428 = vmatprep.subr.bf16.mxu0 0
    %1429 = vmatpush1.bf16.msra.mxu0 0
    %1430 = vmatprep.subr.bf16.mxu0 0
    %1431 = vmatpush1.bf16.msra.mxu0 0
    %1432 = vmatprep.subr.bf16.mxu0 0
    %1433 = vmatpush1.bf16.msra.mxu0 0
    %1434 = vmatprep.subr.bf16.mxu0 0
    %1435 = vmatpush1.bf16.msra.mxu0 0
    %1436 = vmatprep.subr.bf16.mxu0 0
    %1437 = vmatpush1.bf16.msra.mxu0 0
    %1438 = vmatprep.subr.bf16.mxu0 0
    %1439 = vmatpush1.bf16.msra.mxu0 0
    %1440 = vmatprep.subr.bf16.mxu0 0
    %1441 = vmatpush1.bf16.msra.mxu0 0
    %1442 = vmatprep.subr.bf16.mxu0 0
    %1443 = vmatpush1.bf16.msra.mxu0 0
    %1444 = vmatprep.mubr.bf16.mxu0 0
    %1445 = vmatmul.mubr.bf16.gmra.mrb[0].mxu0 %v1411
    %v1446 = vpop.f32.mrb[0].mxu0
    %v1447 = vadd.f32 0.0, %v1446
    %v1448 = vpop.f32.mrb[0].mxu0
    %v1449 = vadd.f32 0.0, %v1448
    %v1450 = vpop.f32.mrb[0].mxu0
    %v1451 = vadd.f32 0.0, %v1450
    %v1452 = vpop.f32.mrb[0].mxu0
    %v1453 = vadd.f32 0.0, %v1452
    %1454 = vdwg.mxu0
    %1455 = vmatprep.subr.bf16.mxu0 0
    %1456 = vmatpush1.bf16.msra.mxu0 %v556
    %1457 = vmatprep.subr.bf16.mxu0 0
    %1458 = vmatpush1.bf16.msra.mxu0 %v559
    %1459 = vmatprep.subr.bf16.mxu0 0
    %1460 = vmatpush1.bf16.msra.mxu0 %v562
    %1461 = vmatprep.subr.bf16.mxu0 0
    %1462 = vmatpush1.bf16.msra.mxu0 %v565
    %1463 = vmatprep.subr.bf16.mxu0 0
    %1464 = vmatpush1.bf16.msra.mxu0 %v568
    %1465 = vmatprep.subr.bf16.mxu0 0
    %1466 = vmatpush1.bf16.msra.mxu0 %v571
    %1467 = vmatprep.subr.bf16.mxu0 0
    %1468 = vmatpush1.bf16.msra.mxu0 %v574
    %1469 = vmatprep.subr.bf16.mxu0 0
    %1470 = vmatpush1.bf16.msra.mxu0 %v577
    %1471 = vmatprep.subr.bf16.mxu0 0
    %1472 = vmatpush1.bf16.msra.mxu0 0
    %1473 = vmatprep.subr.bf16.mxu0 0
    %1474 = vmatpush1.bf16.msra.mxu0 0
    %1475 = vmatprep.subr.bf16.mxu0 0
    %1476 = vmatpush1.bf16.msra.mxu0 0
    %1477 = vmatprep.subr.bf16.mxu0 0
    %1478 = vmatpush1.bf16.msra.mxu0 0
    %1479 = vmatprep.subr.bf16.mxu0 0
    %1480 = vmatpush1.bf16.msra.mxu0 0
    %1481 = vmatprep.subr.bf16.mxu0 0
    %1482 = vmatpush1.bf16.msra.mxu0 0
    %1483 = vmatprep.subr.bf16.mxu0 0
    %1484 = vmatpush1.bf16.msra.mxu0 0
    %1485 = vmatprep.subr.bf16.mxu0 0
    %1486 = vmatpush1.bf16.msra.mxu0 0
    %1487 = vmatprep.mubr.bf16.mxu0 0
    %1488 = vmatmul.mubr.bf16.gmra.mrb[0].mxu0 %v1411
    %v1489 = vpop.f32.mrb[0].mxu0
    %v1490 = vadd.f32 0.0, %v1489
    %v1491 = vpop.f32.mrb[0].mxu0
    %v1492 = vpop.f32.mrb[0].mxu0
    %v1493 = vadd.f32 0.0, %v1492
    %v1494 = vpop.f32.mrb[0].mxu0
    %1495 = vdwg.mxu0
    %v1496 = vadd.f32 %v1405, %v1447
    %v1497 = vadd.f32 %v1406, %v1449
    %v1498 = vadd.f32 %v1408, %v1451
    %v1499 = vadd.f32 %v1409, %v1453
    %v1500 = vxor.u32 %v1496, 2147483648
    %v1501 = vxor.u32 %v1497, 2147483648
    %v1502 = vxor.u32 %v1498, 2147483648
    %v1503 = vxor.u32 %v1499, 2147483648
    %v1504 = vmul.f32 %v1500, 1.442695
    %v1505 = vpow.pop %v1504
    %v1506 = vmul.f32 %v1501, 1.442695
    %v1507 = vpow.pop %v1506
    %v1508 = vmul.f32 %v1502, 1.442695
    %v1509 = vpow.pop %v1508
    %v1510 = vmul.f32 %v1503, 1.442695
    %v1511 = vpow.pop %v1510
    %v1512 = vadd.f32 %v1505, 1.0
    %v1513 = vadd.f32 %v1507, 1.0
    %v1514 = vadd.f32 %v1509, 1.0
    %v1515 = vadd.f32 %v1511, 1.0
    %v1516 = vrcp.pop %v1512
    %v1517 = vmul.f32 1.0, %v1516
    %v1518 = vrcp.pop %v1513
    %v1519 = vmul.f32 1.0, %v1518
    %v1520 = vrcp.pop %v1514
    %v1521 = vmul.f32 1.0, %v1520
    %v1522 = vrcp.pop %v1515
    %v1523 = vmul.f32 1.0, %v1522
    %v1524 = vadd.f32 %v1490, %v718
    %v1525 = vadd.f32 %v1493, %v718
    %v1526 = vmul.f32 %v1517, %v1524
    %v1527 = vmul.f32 %v1521, %v1525
    %v1528 = vadd.f32 %v1407, %v1526
    %v1529 = vadd.f32 %v1410, %v1527
    %v1530 = vtanh.pop %v1528
    %v1531 = vtanh.pop %v1529
    %v1532 = vsub.f32 %v1402, %v1530
    %v1533 = vsub.f32 %v1403, %v1531
    %v1534 = vmul.f32 %v1519, %v1532
    %v1535 = vmul.f32 %v1523, %v1533
    %v1536 = vadd.f32 %v1530, %v1534
    %v1537 = vadd.f32 %v1531, %v1535
    %s1538 = scalar_lea.vmem [#allocation3], 336
    %v1539 = vld [vmem:[%s1538] sm:$0xff]
    %v1540 = vld [vmem:[%s1538 + $0x8] sm:$0xff]
    %v1541 = vld [vmem:[%s1538 + $0x10] sm:$0xff]
    %v1542 = vld [vmem:[%s1538 + $0x18] sm:$0xff]
    %v1543 = vld [vmem:[%s1538 + $0x20] sm:$0xff]
    %v1544 = vld [vmem:[%s1538 + $0x28] sm:$0xff]
    %v1545 = vpack.c.bf16 %v1537, %v1536
    %1546 = vmatprep.subr.bf16.mxu0 %v555
    %1547 = vmatpush1.bf16.msra.mxu0 %v554
    %1548 = vmatprep.subr.bf16.mxu0 %v558
    %1549 = vmatpush1.bf16.msra.mxu0 %v557
    %1550 = vmatprep.subr.bf16.mxu0 %v561
    %1551 = vmatpush1.bf16.msra.mxu0 %v560
    %1552 = vmatprep.subr.bf16.mxu0 %v564
    %1553 = vmatpush1.bf16.msra.mxu0 %v563
    %1554 = vmatprep.subr.bf16.mxu0 %v567
    %1555 = vmatpush1.bf16.msra.mxu0 %v566
    %1556 = vmatprep.subr.bf16.mxu0 %v570
    %1557 = vmatpush1.bf16.msra.mxu0 %v569
    %1558 = vmatprep.subr.bf16.mxu0 %v573
    %1559 = vmatpush1.bf16.msra.mxu0 %v572
    %1560 = vmatprep.subr.bf16.mxu0 %v576
    %1561 = vmatpush1.bf16.msra.mxu0 %v575
    %1562 = vmatprep.subr.bf16.mxu0 0
    %1563 = vmatpush1.bf16.msra.mxu0 0
    %1564 = vmatprep.subr.bf16.mxu0 0
    %1565 = vmatpush1.bf16.msra.mxu0 0
    %1566 = vmatprep.subr.bf16.mxu0 0
    %1567 = vmatpush1.bf16.msra.mxu0 0
    %1568 = vmatprep.subr.bf16.mxu0 0
    %1569 = vmatpush1.bf16.msra.mxu0 0
    %1570 = vmatprep.subr.bf16.mxu0 0
    %1571 = vmatpush1.bf16.msra.mxu0 0
    %1572 = vmatprep.subr.bf16.mxu0 0
    %1573 = vmatpush1.bf16.msra.mxu0 0
    %1574 = vmatprep.subr.bf16.mxu0 0
    %1575 = vmatpush1.bf16.msra.mxu0 0
    %1576 = vmatprep.subr.bf16.mxu0 0
    %1577 = vmatpush1.bf16.msra.mxu0 0
    %1578 = vmatprep.mubr.bf16.mxu0 0
    %1579 = vmatmul.mubr.bf16.gmra.mrb[0].mxu0 %v1545
    %v1580 = vpop.f32.mrb[0].mxu0
    %v1581 = vadd.f32 0.0, %v1580
    %v1582 = vpop.f32.mrb[0].mxu0
    %v1583 = vadd.f32 0.0, %v1582
    %v1584 = vpop.f32.mrb[0].mxu0
    %v1585 = vadd.f32 0.0, %v1584
    %v1586 = vpop.f32.mrb[0].mxu0
    %v1587 = vadd.f32 0.0, %v1586
    %1588 = vdwg.mxu0
    %1589 = vmatprep.subr.bf16.mxu0 0
    %1590 = vmatpush1.bf16.msra.mxu0 %v556
    %1591 = vmatprep.subr.bf16.mxu0 0
    %1592 = vmatpush1.bf16.msra.mxu0 %v559
    %1593 = vmatprep.subr.bf16.mxu0 0
    %1594 = vmatpush1.bf16.msra.mxu0 %v562
    %1595 = vmatprep.subr.bf16.mxu0 0
    %1596 = vmatpush1.bf16.msra.mxu0 %v565
    %1597 = vmatprep.subr.bf16.mxu0 0
    %1598 = vmatpush1.bf16.msra.mxu0 %v568
    %1599 = vmatprep.subr.bf16.mxu0 0
    %1600 = vmatpush1.bf16.msra.mxu0 %v571
    %1601 = vmatprep.subr.bf16.mxu0 0
    %1602 = vmatpush1.bf16.msra.mxu0 %v574
    %1603 = vmatprep.subr.bf16.mxu0 0
    %1604 = vmatpush1.bf16.msra.mxu0 %v577
    %1605 = vmatprep.subr.bf16.mxu0 0
    %1606 = vmatpush1.bf16.msra.mxu0 0
    %1607 = vmatprep.subr.bf16.mxu0 0
    %1608 = vmatpush1.bf16.msra.mxu0 0
    %1609 = vmatprep.subr.bf16.mxu0 0
    %1610 = vmatpush1.bf16.msra.mxu0 0
    %1611 = vmatprep.subr.bf16.mxu0 0
    %1612 = vmatpush1.bf16.msra.mxu0 0
    %1613 = vmatprep.subr.bf16.mxu0 0
    %1614 = vmatpush1.bf16.msra.mxu0 0
    %1615 = vmatprep.subr.bf16.mxu0 0
    %1616 = vmatpush1.bf16.msra.mxu0 0
    %1617 = vmatprep.subr.bf16.mxu0 0
    %1618 = vmatpush1.bf16.msra.mxu0 0
    %1619 = vmatprep.subr.bf16.mxu0 0
    %1620 = vmatpush1.bf16.msra.mxu0 0
    %1621 = vmatprep.mubr.bf16.mxu0 0
    %1622 = vmatmul.mubr.bf16.gmra.mrb[0].mxu0 %v1545
    %v1623 = vpop.f32.mrb[0].mxu0
    %v1624 = vadd.f32 0.0, %v1623
    %v1625 = vpop.f32.mrb[0].mxu0
    %v1626 = vpop.f32.mrb[0].mxu0
    %v1627 = vadd.f32 0.0, %v1626
    %v1628 = vpop.f32.mrb[0].mxu0
    %1629 = vdwg.mxu0
    %v1630 = vadd.f32 %v1539, %v1581
    %v1631 = vadd.f32 %v1540, %v1583
    %v1632 = vadd.f32 %v1542, %v1585
    %v1633 = vadd.f32 %v1543, %v1587
    %v1634 = vxor.u32 %v1630, 2147483648
    %v1635 = vxor.u32 %v1631, 2147483648
    %v1636 = vxor.u32 %v1632, 2147483648
    %v1637 = vxor.u32 %v1633, 2147483648
    %v1638 = vmul.f32 %v1634, 1.442695
    %v1639 = vpow.pop %v1638
    %v1640 = vmul.f32 %v1635, 1.442695
    %v1641 = vpow.pop %v1640
    %v1642 = vmul.f32 %v1636, 1.442695
    %v1643 = vpow.pop %v1642
    %v1644 = vmul.f32 %v1637, 1.442695
    %v1645 = vpow.pop %v1644
    %v1646 = vadd.f32 %v1639, 1.0
    %v1647 = vadd.f32 %v1641, 1.0
    %v1648 = vadd.f32 %v1643, 1.0
    %v1649 = vadd.f32 %v1645, 1.0
    %v1650 = vrcp.pop %v1646
    %v1651 = vmul.f32 1.0, %v1650
    %v1652 = vrcp.pop %v1647
    %v1653 = vmul.f32 1.0, %v1652
    %v1654 = vrcp.pop %v1648
    %v1655 = vmul.f32 1.0, %v1654
    %v1656 = vrcp.pop %v1649
    %v1657 = vmul.f32 1.0, %v1656
    %v1658 = vadd.f32 %v1624, %v718
    %v1659 = vadd.f32 %v1627, %v718
    %v1660 = vmul.f32 %v1651, %v1658
    %v1661 = vmul.f32 %v1655, %v1659
    %v1662 = vadd.f32 %v1541, %v1660
    %v1663 = vadd.f32 %v1544, %v1661
    %v1664 = vtanh.pop %v1662
    %v1665 = vtanh.pop %v1663
    %v1666 = vsub.f32 %v1536, %v1664
    %v1667 = vsub.f32 %v1537, %v1665
    %v1668 = vmul.f32 %v1653, %v1666
    %v1669 = vmul.f32 %v1657, %v1667
    %v1670 = vadd.f32 %v1664, %v1668
    %v1671 = vadd.f32 %v1665, %v1669
    %1672 = vst [vmem:[#allocation2] sm:$0xff] %v1670
    %1673 = vst [vmem:[#allocation2 + $0x8] sm:$0xff] %v1671
    // Predicated region
    $region38: #{tpu_custom_call.1} parent=1 // pred_check
      %p1674 = pneg %p42
    $region39: #{tpu_custom_call.1} parent=1 // pred_check_branch
      %1676 = sbr.rel (%p1674) target = $region41
    $region40: #{tpu_custom_call.1} parent=1 // pred_region
      %v1677 = vpack.c.bf16 %v1671, %v1670
      %v1678 = vld [vmem:[%s5] sm:$0xf]
      %v1679 = vld [vmem:[%s5 + $0x4] sm:$0xf]
      %v1680 = vld [vmem:[%s5 + $0x8] sm:$0xf]
      %v1681 = vld [vmem:[%s5 + $0xc] sm:$0xf]
      %v1682 = vld [vmem:[%s5 + $0x10] sm:$0xf]
      %v1683 = vld [vmem:[%s5 + $0x14] sm:$0xf]
      %v1684 = vld [vmem:[%s5 + $0x18] sm:$0xf]
      %v1685 = vld [vmem:[%s5 + $0x1c] sm:$0xf]
      %v1686 = vld [vmem:[%s5 + $0x20] sm:$0xf]
      %v1687 = vld [vmem:[%s5 + $0x24] sm:$0xf]
      %v1688 = vld [vmem:[%s5 + $0x28] sm:$0xf]
      %v1689 = vld [vmem:[%s5 + $0x2c] sm:$0xf]
      %v1690 = vld [vmem:[%s5 + $0x30] sm:$0xf]
      %v1691 = vld [vmem:[%s5 + $0x34] sm:$0xf]
      %v1692 = vld [vmem:[%s5 + $0x38] sm:$0xf]
      %v1693 = vld [vmem:[%s5 + $0x3c] sm:$0xf]
      %v1694 = vld [vmem:[%s6] sm:$0x1]
      %v1696 = vlaneseq
      %v1697 = vshrl.u32 %v1696, 7
      %v1698 = vsub.s32 0, %v1697
      %v1699 = vrot.slane %v1694, %v1698
      %v1717 = vunpack.c.l.b16 %v1678
      %v1718 = vunpack.c.l.b16 %v1679
      %v1719 = vunpack.c.l.b16 %v1680
      %v1720 = vunpack.c.l.b16 %v1681
      %v1721 = vunpack.c.l.b16 %v1682
      %v1722 = vunpack.c.l.b16 %v1683
      %v1723 = vunpack.c.l.b16 %v1684
      %v1724 = vunpack.c.l.b16 %v1685
      %v1725 = vunpack.c.l.b16 %v1686
      %v1726 = vunpack.c.l.b16 %v1687
      %v1727 = vunpack.c.l.b16 %v1688
      %v1728 = vunpack.c.l.b16 %v1689
      %v1729 = vunpack.c.l.b16 %v1690
      %v1730 = vunpack.c.l.b16 %v1691
      %v1731 = vunpack.c.l.b16 %v1692
      %v1732 = vunpack.c.l.b16 %v1693
      %v1733 = vpack.c.b16 %v1718, %v1717
      %v1734 = vpack.c.b16 %v1720, %v1719
      %v1735 = vpack.c.b16 %v1722, %v1721
      %v1736 = vpack.c.b16 %v1724, %v1723
      %v1737 = vpack.c.b16 %v1726, %v1725
      %v1738 = vpack.c.b16 %v1728, %v1727
      %v1739 = vpack.c.b16 %v1730, %v1729
      %v1740 = vpack.c.b16 %v1732, %v1731
      %1749 = vmatprep.subr.bf16.mxu0 0
      %1750 = vmatpush1.bf16.msra.mxu0 %v1733
      %1751 = vmatprep.subr.bf16.mxu0 0
      %1752 = vmatpush1.bf16.msra.mxu0 %v1734
      %1753 = vmatprep.subr.bf16.mxu0 0
      %1754 = vmatpush1.bf16.msra.mxu0 %v1735
      %1755 = vmatprep.subr.bf16.mxu0 0
      %1756 = vmatpush1.bf16.msra.mxu0 %v1736
      %1757 = vmatprep.subr.bf16.mxu0 0
      %1758 = vmatpush1.bf16.msra.mxu0 %v1737
      %1759 = vmatprep.subr.bf16.mxu0 0
      %1760 = vmatpush1.bf16.msra.mxu0 %v1738
      %1761 = vmatprep.subr.bf16.mxu0 0
      %1762 = vmatpush1.bf16.msra.mxu0 %v1739
      %1763 = vmatprep.subr.bf16.mxu0 0
      %1764 = vmatpush1.bf16.msra.mxu0 %v1740
      %1765 = vmatprep.subr.bf16.mxu0 0
      %1766 = vmatpush1.bf16.msra.mxu0 0
      %1767 = vmatprep.subr.bf16.mxu0 0
      %1768 = vmatpush1.bf16.msra.mxu0 0
      %1769 = vmatprep.subr.bf16.mxu0 0
      %1770 = vmatpush1.bf16.msra.mxu0 0
      %1771 = vmatprep.subr.bf16.mxu0 0
      %1772 = vmatpush1.bf16.msra.mxu0 0
      %1773 = vmatprep.subr.bf16.mxu0 0
      %1774 = vmatpush1.bf16.msra.mxu0 0
      %1775 = vmatprep.subr.bf16.mxu0 0
      %1776 = vmatpush1.bf16.msra.mxu0 0
      %1777 = vmatprep.subr.bf16.mxu0 0
      %1778 = vmatpush1.bf16.msra.mxu0 0
      %1779 = vmatprep.subr.bf16.mxu0 0
      %1780 = vmatpush1.bf16.msra.mxu0 0
      %1781 = vmatprep.mubr.bf16.mxu0 0
      %1782 = vmatmul.mubr.bf16.gmra.mrb[0].mxu0 %v1677
      %v1783 = vpop.f32.mrb[0].mxu0
      %v1784 = vadd.f32 %v1699, %v1783
      %v1785 = vpop.f32.mrb[0].mxu0
      %v1786 = vpop.f32.mrb[0].mxu0
      %v1787 = vadd.f32 %v1699, %v1786
      %v1788 = vpop.f32.mrb[0].mxu0
      %1789 = vdwg.mxu0
      %1790 = vst [vmem:[#allocation7] sm:$0xff] %v1784
      %1791 = vst [vmem:[#allocation7 + $0x8] sm:$0xff] %v1787
    $region41: #{tpu_custom_call.1} parent=1 // pred_fallthru
      _
    // Predicated region
    $region42: #{tpu_custom_call.1} parent=1 // pred_check
      _
    $region43: #{tpu_custom_call.1} parent=1 // pred_check_branch
      %1793 = sbr.rel (0) target = $region45
    $region44: #{tpu_custom_call.1} parent=1 // pred_region
      %s1795 = ssub.s32 256, 256
      %1796 = vsyncadd [#allocation6], %s1795
      %s1797 = sshll.u32 [#allocation7], 4
      %s1798 = int_to_ptr.vmem [resolvable:$true] %s1797
      %1803 = dma.vmem_to_hbm [thread:$0]  %s1798, 256, %s7, [#allocation6], 128, 128, 8
    $region45: #{tpu_custom_call.1} parent=1 // pred_fallthru
      _
    // Predicated region
    $region46: #{tpu_custom_call.1} parent=1 // pred_check
      _
    $region47: #{tpu_custom_call.1} parent=1 // pred_check_branch
      %1805 = sbr.rel (0) target = $region49
    $region48: #{tpu_custom_call.1} parent=1 // pred_region
      %1806 = dma.done [#allocation6], 256
    $region49: #{tpu_custom_call.1} parent=1 // pred_fallthru
      _
    %1807 = vsyncpa [#allocation5], 1
    %1808 = vsyncpa [#allocation6], 1

</llo_original>
